<compile_context>
chip_gen: v6e
topology: v6e:2x2x1
jax: 0.10.0
libtpu: 0.0.40
codegen_flags: <defaults>
</compile_context>

<pallas_src>
import math
import functools

import jax
import jax.numpy as jnp
from jax import lax
from jax.experimental import pallas as pl
from jax.experimental.pallas import tpu as pltpu


# ----------------------------------------------------------------------------
# Fused Pallas kernel: num_layers x LSTM + FC head, single invocation
# ----------------------------------------------------------------------------
def _fused_lstm_fc_kernel(num_layers, T, B, H, *refs):
    """refs layout (inputs, outputs, scratch):
      inputs : x2d_ref (T*B, D_in),
               [w_ih_t (D_l,4H), w_hh_t (H,4H), bias (1,4H)] * num_layers,
               fc_w_ref (H, C_pad), fc_b_ref (1, C_pad)
      outputs: out_ref (T*B, C_pad)
      scratch: xproj_ref (T*B, 4H), hid_ref (T*B, H)
    """
    x2d_ref = refs[0]
    layer_refs = refs[1:1 + 3 * num_layers]
    fc_w_ref = refs[1 + 3 * num_layers]
    fc_b_ref = refs[2 + 3 * num_layers]
    out_ref = refs[3 + 3 * num_layers]
    xproj_ref = refs[4 + 3 * num_layers]
    hid_ref = refs[5 + 3 * num_layers]

    for l in range(num_layers):
        w_ih_ref = layer_refs[3 * l + 0]
        w_hh_ref = layer_refs[3 * l + 1]
        b_ref = layer_refs[3 * l + 2]

        # ---- hoisted input projection: ONE big matmul for all timesteps ----
        inp2d = x2d_ref[...] if l == 0 else hid_ref[...]       # (T*B, D_l)
        xproj_ref[...] = (
            jnp.dot(inp2d, w_ih_ref[...], preferred_element_type=jnp.float32)
            + b_ref[...])                                      # (T*B, 4H)

        # ---- sequential recurrence: only h @ W_hh on the critical path ----
        w_hh = w_hh_ref[...]                                   # (H, 4H), kept hot
        h = jnp.zeros((B, H), jnp.float32)
        c = jnp.zeros((B, H), jnp.float32)
        for t in range(T):                                     # static unroll (T small)
            gates = (xproj_ref[t * B:(t + 1) * B, :]
                     + jnp.dot(h, w_hh, preferred_element_type=jnp.float32))
            i_g = jax.nn.sigmoid(gates[:, 0 * H:1 * H])
            f_g = jax.nn.sigmoid(gates[:, 1 * H:2 * H])
            g_g = jnp.tanh(gates[:, 2 * H:3 * H])
            o_g = jax.nn.sigmoid(gates[:, 3 * H:4 * H])
            c = f_g * c + i_g * g_g
            h = o_g * jnp.tanh(c)
            hid_ref[t * B:(t + 1) * B, :] = h                  # stays in VMEM

    # ---- FC epilogue over all timesteps: lane-dense (C padded to 128) ----
    out_ref[...] = (
        jnp.dot(hid_ref[...], fc_w_ref[...], preferred_element_type=jnp.float32)
        + fc_b_ref[...])


def _round_up(x, m):
    return ((x + m - 1) // m) * m


@jax.jit
def lstm_model_forward(x, params):
    """x: (B, T, input_size) -> (B, T, num_classes). Mirrors LSTMModel.forward."""
    B, T, D_in = x.shape
    num_layers = len(params["lstm"])
    H = params["lstm"][0][1].shape[0]
    C = params["fc_w_t"].shape[1]
    C_pad = _round_up(C, 128)

    # (B, T, D) -> time-major 2-D (T*B, D).  Tiny layout op, left to XLA.
    x2d = jnp.transpose(x, (1, 0, 2)).reshape(T * B, D_in).astype(jnp.float32)

    flat_w = []
    for l in range(num_layers):
        w_ih_t, w_hh_t, bias = params["lstm"][l]
        flat_w += [w_ih_t, w_hh_t, bias]

    # Pad FC head to a lane-dense 128-wide output; sliced back below.
    fc_w_pad = jnp.zeros((H, C_pad), jnp.float32).at[:, :C].set(params["fc_w_t"])
    fc_b_pad = jnp.zeros((1, C_pad), jnp.float32).at[:, :C].set(params["fc_b"])

    kernel = functools.partial(_fused_lstm_fc_kernel, num_layers, T, B, H)
    out2d = pl.pallas_call(
        kernel,
        out_shape=jax.ShapeDtypeStruct((T * B, C_pad), jnp.float32),
        scratch_shapes=[
            pltpu.VMEM((T * B, 4 * H), jnp.float32),   # hoisted input projections
            pltpu.VMEM((T * B, H), jnp.float32),       # per-layer hidden outputs
        ],
    )(x2d, *flat_w, fc_w_pad, fc_b_pad)

    out = out2d.reshape(T, B, C_pad)[:, :, :C]
    return jnp.transpose(out, (1, 0, 2))               # (B, T, C)


# ----------------------------------------------------------------------------
# Deterministic parameter init (matches nn.LSTM / nn.Linear shapes & init range)
# ----------------------------------------------------------------------------
def init_params(key, input_size, hidden_size, num_layers, num_classes):
    k = 1.0 / math.sqrt(hidden_size)
    params = {"lstm": []}
    for l in range(num_layers):
        d_in = input_size if l == 0 else hidden_size
        key, k1, k2, k3, k4 = jax.random.split(key, 5)
        w_ih = jax.random.uniform(k1, (4 * hidden_size, d_in),
                                  minval=-k, maxval=k, dtype=jnp.float32)
        w_hh = jax.random.uniform(k2, (4 * hidden_size, hidden_size),
                                  minval=-k, maxval=k, dtype=jnp.float32)
        b_ih = jax.random.uniform(k3, (4 * hidden_size,),
                                  minval=-k, maxval=k, dtype=jnp.float32)
        b_hh = jax.random.uniform(k4, (4 * hidden_size,),
                                  minval=-k, maxval=k, dtype=jnp.float32)
        # store transposed for x @ W layout + fused bias (b_ih + b_hh)
        params["lstm"].append((w_ih.T, w_hh.T, (b_ih + b_hh)[None, :]))
    key, k5, k6 = jax.random.split(key, 3)
    fc_w = jax.random.uniform(k5, (num_classes, hidden_size),
                              minval=-k, maxval=k, dtype=jnp.float32)
    fc_b = jax.random.uniform(k6, (num_classes,),
                              minval=-k, maxval=k, dtype=jnp.float32)
    params["fc_w_t"] = fc_w.T
    params["fc_b"] = fc_b[None, :]
    return params


# ----------------------------------------------------------------------------
# Pure-JAX reference (PyTorch LSTM semantics) for verification
# ----------------------------------------------------------------------------
def reference_forward(x, params, num_layers, hidden_size):
    B, T, _ = x.shape
    h_seq = x
    for l in range(num_layers):
        w_ih_t, w_hh_t, bias = params["lstm"][l]

        def step(carry, x_t):
            h, c = carry
            gates = x_t @ w_ih_t + h @ w_hh_t + bias[0]
            i_g, f_g, g_g, o_g = jnp.split(gates, 4, axis=-1)
            i_g = jax.nn.sigmoid(i_g)
            f_g = jax.nn.sigmoid(f_g)
            g_g = jnp.tanh(g_g)
            o_g = jax.nn.sigmoid(o_g)
            c_new = f_g * c + i_g * g_g
            h_new = o_g * jnp.tanh(c_new)
            return (h_new, c_new), h_new

        h0 = jnp.zeros((B, hidden_size), jnp.float32)
        c0 = jnp.zeros((B, hidden_size), jnp.float32)
        _, hs = lax.scan(step, (h0, c0), jnp.transpose(h_seq, (1, 0, 2)))
        h_seq = jnp.transpose(hs, (1, 0, 2))
    return h_seq @ params["fc_w_t"] + params["fc_b"][0]


# ----------------------------------------------------------------------------
if __name__ == "__main__":
    # Small shapes consistent with the module: x is (batch, seq, input_size)
    batch, seq, input_size = 2, 8, 16
    hidden_size, num_layers, num_classes = 32, 2, 10

    key = jax.random.PRNGKey(0)
    key, kx = jax.random.split(key)
    x = jax.random.normal(kx, (batch, seq, input_size), dtype=jnp.float32)

    params = init_params(key, input_size, hidden_size, num_layers, num_classes)

    out = lstm_model_forward(x, params)
    out = jax.block_until_ready(out)

    ref = reference_forward(x, params, num_layers, hidden_size)
    assert out.shape == (batch, seq, num_classes), out.shape
    max_err = jnp.max(jnp.abs(out - ref))
    assert jnp.allclose(out, ref, atol=1e-5, rtol=1e-5), f"max err {max_err}"

    print("KERNEL_OK")
</pallas_src>

<mosaic_0001>
module attributes {stable_mosaic.version = 11 : i64} {
  func.func @_fused_lstm_fc_kernel(%arg0: memref<16x16xf32, #tpu.memory_space<vmem>>, %arg1: memref<16x128xf32, #tpu.memory_space<vmem>>, %arg2: memref<32x128xf32, #tpu.memory_space<vmem>>, %arg3: memref<1x128xf32, #tpu.memory_space<vmem>>, %arg4: memref<32x128xf32, #tpu.memory_space<vmem>>, %arg5: memref<32x128xf32, #tpu.memory_space<vmem>>, %arg6: memref<1x128xf32, #tpu.memory_space<vmem>>, %arg7: memref<32x128xf32, #tpu.memory_space<vmem>>, %arg8: memref<1x128xf32, #tpu.memory_space<vmem>>, %arg9: memref<16x128xf32, #tpu.memory_space<vmem>>, %arg10: memref<16x128xf32, #tpu.memory_space<vmem>>, %arg11: memref<16x32xf32, #tpu.memory_space<vmem>>) attributes {dimension_semantics = [], scalar_prefetch = 0 : i64, scratch_operands = 2 : i64, tpu.core_type = #tpu.core_type<tc>} {
    %c0 = arith.constant 0 : index
    %c0_0 = arith.constant 0 : index
    %0 = vector.load %arg0[%c0, %c0_0] : memref<16x16xf32, #tpu.memory_space<vmem>>, vector<16x16xf32>
    %c0_1 = arith.constant 0 : index
    %c0_2 = arith.constant 0 : index
    %1 = vector.load %arg1[%c0_1, %c0_2] : memref<16x128xf32, #tpu.memory_space<vmem>>, vector<16x128xf32>
    %cst = arith.constant dense<0.000000e+00> : vector<16x128xf32>
    %2 = tpu.matmul %0, %1, %cst {dimension_numbers = #tpu.dot_dimension_numbers<[1], [0], [0], [1], [0, 0, 1, 1], [], []>} : vector<16x16xf32>, vector<16x128xf32>, vector<16x128xf32> -> vector<16x128xf32>
    %c0_3 = arith.constant 0 : index
    %c0_4 = arith.constant 0 : index
    %3 = vector.load %arg3[%c0_3, %c0_4] : memref<1x128xf32, #tpu.memory_space<vmem>>, vector<1x128xf32>
    %4 = vector.broadcast %3 : vector<1x128xf32> to vector<16x128xf32>
    %5 = arith.addf %2, %4 : vector<16x128xf32>
    %c0_5 = arith.constant 0 : index
    %c0_6 = arith.constant 0 : index
    %6 = vector.load %arg10[%c0_5, %c0_6] : memref<16x128xf32, #tpu.memory_space<vmem>>, vector<16x128xf32>
    tpu.vector_store %arg10[%c0_5, %c0_6], %5 {strides = array<i32>} : memref<16x128xf32, #tpu.memory_space<vmem>>, vector<16x128xf32>,
    %c0_7 = arith.constant 0 : index
    %c0_8 = arith.constant 0 : index
    %7 = vector.load %arg2[%c0_7, %c0_8] : memref<32x128xf32, #tpu.memory_space<vmem>>, vector<32x128xf32>
    %cst_9 = arith.constant 0.000000e+00 : f32
    %8 = vector.broadcast %cst_9 : f32 to vector<2x32xf32>
    %cst_10 = arith.constant 0.000000e+00 : f32
    %9 = vector.broadcast %cst_10 : f32 to vector<2x32xf32>
    %c0_11 = arith.constant 0 : index
    %c0_12 = arith.constant 0 : index
    %10 = vector.load %arg10[%c0_11, %c0_12] : memref<16x128xf32, #tpu.memory_space<vmem>>, vector<2x128xf32>
    %cst_13 = arith.constant dense<0.000000e+00> : vector<2x128xf32>
    %11 = tpu.matmul %8, %7, %cst_13 {dimension_numbers = #tpu.dot_dimension_numbers<[1], [0], [0], [1], [0, 0, 1, 1], [], []>} : vector<2x32xf32>, vector<32x128xf32>, vector<2x128xf32> -> vector<2x128xf32>
    %12 = arith.addf %10, %11 : vector<2x128xf32>
    %13 = vector.extract_strided_slice %12 {offsets = [0, 0], sizes = [2, 32], strides = [1, 1]} : vector<2x128xf32> to vector<2x32xf32>
    %14 = arith.negf %13 : vector<2x32xf32>
    %15 = math.exp %14 : vector<2x32xf32>
    %cst_14 = arith.constant 1.000000e+00 : f32
    %16 = vector.broadcast %cst_14 : f32 to vector<2x32xf32>
    %17 = arith.addf %16, %15 : vector<2x32xf32>
    %18 = arith.divf %16, %17 : vector<2x32xf32>
    %19 = vector.extract_strided_slice %12 {offsets = [0, 32], sizes = [2, 32], strides = [1, 1]} : vector<2x128xf32> to vector<2x32xf32>
    %20 = arith.negf %19 : vector<2x32xf32>
    %21 = math.exp %20 : vector<2x32xf32>
    %cst_15 = arith.constant 1.000000e+00 : f32
    %22 = vector.broadcast %cst_15 : f32 to vector<2x32xf32>
    %23 = arith.addf %22, %21 : vector<2x32xf32>
    %24 = arith.divf %22, %23 : vector<2x32xf32>
    %25 = vector.extract_strided_slice %12 {offsets = [0, 64], sizes = [2, 32], strides = [1, 1]} : vector<2x128xf32> to vector<2x32xf32>
    %26 = math.tanh %25 : vector<2x32xf32>
    %27 = vector.extract_strided_slice %12 {offsets = [0, 96], sizes = [2, 32], strides = [1, 1]} : vector<2x128xf32> to vector<2x32xf32>
    %28 = arith.negf %27 : vector<2x32xf32>
    %29 = math.exp %28 : vector<2x32xf32>
    %cst_16 = arith.constant 1.000000e+00 : f32
    %30 = vector.broadcast %cst_16 : f32 to vector<2x32xf32>
    %31 = arith.addf %30, %29 : vector<2x32xf32>
    %32 = arith.divf %30, %31 : vector<2x32xf32>
    %33 = arith.mulf %24, %9 : vector<2x32xf32>
    %34 = arith.mulf %18, %26 : vector<2x32xf32>
    %35 = arith.addf %33, %34 : vector<2x32xf32>
    %36 = math.tanh %35 : vector<2x32xf32>
    %37 = arith.mulf %32, %36 : vector<2x32xf32>
    %c0_17 = arith.constant 0 : index
    %c0_18 = arith.constant 0 : index
    %38 = vector.load %arg11[%c0_17, %c0_18] : memref<16x32xf32, #tpu.memory_space<vmem>>, vector<2x32xf32>
    tpu.vector_store %arg11[%c0_17, %c0_18], %37 {strides = array<i32>} : memref<16x32xf32, #tpu.memory_space<vmem>>, vector<2x32xf32>,
    %c2 = arith.constant 2 : index
    %c0_19 = arith.constant 0 : index
    %39 = vector.load %arg10[%c2, %c0_19] : memref<16x128xf32, #tpu.memory_space<vmem>>, vector<2x128xf32>
    %cst_20 = arith.constant dense<0.000000e+00> : vector<2x128xf32>
    %40 = tpu.matmul %37, %7, %cst_20 {dimension_numbers = #tpu.dot_dimension_numbers<[1], [0], [0], [1], [0, 0, 1, 1], [], []>} : vector<2x32xf32>, vector<32x128xf32>, vector<2x128xf32> -> vector<2x128xf32>
    %41 = arith.addf %39, %40 : vector<2x128xf32>
    %42 = vector.extract_strided_slice %41 {offsets = [0, 0], sizes = [2, 32], strides = [1, 1]} : vector<2x128xf32> to vector<2x32xf32>
    %43 = arith.negf %42 : vector<2x32xf32>
    %44 = math.exp %43 : vector<2x32xf32>
    %cst_21 = arith.constant 1.000000e+00 : f32
    %45 = vector.broadcast %cst_21 : f32 to vector<2x32xf32>
    %46 = arith.addf %45, %44 : vector<2x32xf32>
    %47 = arith.divf %45, %46 : vector<2x32xf32>
    %48 = vector.extract_strided_slice %41 {offsets = [0, 32], sizes = [2, 32], strides = [1, 1]} : vector<2x128xf32> to vector<2x32xf32>
    %49 = arith.negf %48 : vector<2x32xf32>
    %50 = math.exp %49 : vector<2x32xf32>
    %cst_22 = arith.constant 1.000000e+00 : f32
    %51 = vector.broadcast %cst_22 : f32 to vector<2x32xf32>
    %52 = arith.addf %51, %50 : vector<2x32xf32>
    %53 = arith.divf %51, %52 : vector<2x32xf32>
    %54 = vector.extract_strided_slice %41 {offsets = [0, 64], sizes = [2, 32], strides = [1, 1]} : vector<2x128xf32> to vector<2x32xf32>
    %55 = math.tanh %54 : vector<2x32xf32>
    %56 = vector.extract_strided_slice %41 {offsets = [0, 96], sizes = [2, 32], strides = [1, 1]} : vector<2x128xf32> to vector<2x32xf32>
    %57 = arith.negf %56 : vector<2x32xf32>
    %58 = math.exp %57 : vector<2x32xf32>
    %cst_23 = arith.constant 1.000000e+00 : f32
    %59 = vector.broadcast %cst_23 : f32 to vector<2x32xf32>
    %60 = arith.addf %59, %58 : vector<2x32xf32>
    %61 = arith.divf %59, %60 : vector<2x32xf32>
    %62 = arith.mulf %53, %35 : vector<2x32xf32>
    %63 = arith.mulf %47, %55 : vector<2x32xf32>
    %64 = arith.addf %62, %63 : vector<2x32xf32>
    %65 = math.tanh %64 : vector<2x32xf32>
    %66 = arith.mulf %61, %65 : vector<2x32xf32>
    %c2_24 = arith.constant 2 : index
    %c0_25 = arith.constant 0 : index
    %67 = vector.load %arg11[%c2_24, %c0_25] : memref<16x32xf32, #tpu.memory_space<vmem>>, vector<2x32xf32>
    tpu.vector_store %arg11[%c2_24, %c0_25], %66 {strides = array<i32>} : memref<16x32xf32, #tpu.memory_space<vmem>>, vector<2x32xf32>,
    %c4 = arith.constant 4 : index
    %c0_26 = arith.constant 0 : index
    %68 = vector.load %arg10[%c4, %c0_26] : memref<16x128xf32, #tpu.memory_space<vmem>>, vector<2x128xf32>
    %cst_27 = arith.constant dense<0.000000e+00> : vector<2x128xf32>
    %69 = tpu.matmul %66, %7, %cst_27 {dimension_numbers = #tpu.dot_dimension_numbers<[1], [0], [0], [1], [0, 0, 1, 1], [], []>} : vector<2x32xf32>, vector<32x128xf32>, vector<2x128xf32> -> vector<2x128xf32>
    %70 = arith.addf %68, %69 : vector<2x128xf32>
    %71 = vector.extract_strided_slice %70 {offsets = [0, 0], sizes = [2, 32], strides = [1, 1]} : vector<2x128xf32> to vector<2x32xf32>
    %72 = arith.negf %71 : vector<2x32xf32>
    %73 = math.exp %72 : vector<2x32xf32>
    %cst_28 = arith.constant 1.000000e+00 : f32
    %74 = vector.broadcast %cst_28 : f32 to vector<2x32xf32>
    %75 = arith.addf %74, %73 : vector<2x32xf32>
    %76 = arith.divf %74, %75 : vector<2x32xf32>
    %77 = vector.extract_strided_slice %70 {offsets = [0, 32], sizes = [2, 32], strides = [1, 1]} : vector<2x128xf32> to vector<2x32xf32>
    %78 = arith.negf %77 : vector<2x32xf32>
    %79 = math.exp %78 : vector<2x32xf32>
    %cst_29 = arith.constant 1.000000e+00 : f32
    %80 = vector.broadcast %cst_29 : f32 to vector<2x32xf32>
    %81 = arith.addf %80, %79 : vector<2x32xf32>
    %82 = arith.divf %80, %81 : vector<2x32xf32>
    %83 = vector.extract_strided_slice %70 {offsets = [0, 64], sizes = [2, 32], strides = [1, 1]} : vector<2x128xf32> to vector<2x32xf32>
    %84 = math.tanh %83 : vector<2x32xf32>
    %85 = vector.extract_strided_slice %70 {offsets = [0, 96], sizes = [2, 32], strides = [1, 1]} : vector<2x128xf32> to vector<2x32xf32>
    %86 = arith.negf %85 : vector<2x32xf32>
    %87 = math.exp %86 : vector<2x32xf32>
    %cst_30 = arith.constant 1.000000e+00 : f32
    %88 = vector.broadcast %cst_30 : f32 to vector<2x32xf32>
    %89 = arith.addf %88, %87 : vector<2x32xf32>
    %90 = arith.divf %88, %89 : vector<2x32xf32>
    %91 = arith.mulf %82, %64 : vector<2x32xf32>
    %92 = arith.mulf %76, %84 : vector<2x32xf32>
    %93 = arith.addf %91, %92 : vector<2x32xf32>
    %94 = math.tanh %93 : vector<2x32xf32>
    %95 = arith.mulf %90, %94 : vector<2x32xf32>
    %c4_31 = arith.constant 4 : index
    %c0_32 = arith.constant 0 : index
    %96 = vector.load %arg11[%c4_31, %c0_32] : memref<16x32xf32, #tpu.memory_space<vmem>>, vector<2x32xf32>
    tpu.vector_store %arg11[%c4_31, %c0_32], %95 {strides = array<i32>} : memref<16x32xf32, #tpu.memory_space<vmem>>, vector<2x32xf32>,
    %c6 = arith.constant 6 : index
    %c0_33 = arith.constant 0 : index
    %97 = vector.load %arg10[%c6, %c0_33] : memref<16x128xf32, #tpu.memory_space<vmem>>, vector<2x128xf32>
    %cst_34 = arith.constant dense<0.000000e+00> : vector<2x128xf32>
    %98 = tpu.matmul %95, %7, %cst_34 {dimension_numbers = #tpu.dot_dimension_numbers<[1], [0], [0], [1], [0, 0, 1, 1], [], []>} : vector<2x32xf32>, vector<32x128xf32>, vector<2x128xf32> -> vector<2x128xf32>
    %99 = arith.addf %97, %98 : vector<2x128xf32>
    %100 = vector.extract_strided_slice %99 {offsets = [0, 0], sizes = [2, 32], strides = [1, 1]} : vector<2x128xf32> to vector<2x32xf32>
    %101 = arith.negf %100 : vector<2x32xf32>
    %102 = math.exp %101 : vector<2x32xf32>
    %cst_35 = arith.constant 1.000000e+00 : f32
    %103 = vector.broadcast %cst_35 : f32 to vector<2x32xf32>
    %104 = arith.addf %103, %102 : vector<2x32xf32>
    %105 = arith.divf %103, %104 : vector<2x32xf32>
    %106 = vector.extract_strided_slice %99 {offsets = [0, 32], sizes = [2, 32], strides = [1, 1]} : vector<2x128xf32> to vector<2x32xf32>
    %107 = arith.negf %106 : vector<2x32xf32>
    %108 = math.exp %107 : vector<2x32xf32>
    %cst_36 = arith.constant 1.000000e+00 : f32
    %109 = vector.broadcast %cst_36 : f32 to vector<2x32xf32>
    %110 = arith.addf %109, %108 : vector<2x32xf32>
    %111 = arith.divf %109, %110 : vector<2x32xf32>
    %112 = vector.extract_strided_slice %99 {offsets = [0, 64], sizes = [2, 32], strides = [1, 1]} : vector<2x128xf32> to vector<2x32xf32>
    %113 = math.tanh %112 : vector<2x32xf32>
    %114 = vector.extract_strided_slice %99 {offsets = [0, 96], sizes = [2, 32], strides = [1, 1]} : vector<2x128xf32> to vector<2x32xf32>
    %115 = arith.negf %114 : vector<2x32xf32>
    %116 = math.exp %115 : vector<2x32xf32>
    %cst_37 = arith.constant 1.000000e+00 : f32
    %117 = vector.broadcast %cst_37 : f32 to vector<2x32xf32>
    %118 = arith.addf %117, %116 : vector<2x32xf32>
    %119 = arith.divf %117, %118 : vector<2x32xf32>
    %120 = arith.mulf %111, %93 : vector<2x32xf32>
    %121 = arith.mulf %105, %113 : vector<2x32xf32>
    %122 = arith.addf %120, %121 : vector<2x32xf32>
    %123 = math.tanh %122 : vector<2x32xf32>
    %124 = arith.mulf %119, %123 : vector<2x32xf32>
    %c6_38 = arith.constant 6 : index
    %c0_39 = arith.constant 0 : index
    %125 = vector.load %arg11[%c6_38, %c0_39] : memref<16x32xf32, #tpu.memory_space<vmem>>, vector<2x32xf32>
    tpu.vector_store %arg11[%c6_38, %c0_39], %124 {strides = array<i32>} : memref<16x32xf32, #tpu.memory_space<vmem>>, vector<2x32xf32>,
    %c8 = arith.constant 8 : index
    %c0_40 = arith.constant 0 : index
    %126 = vector.load %arg10[%c8, %c0_40] : memref<16x128xf32, #tpu.memory_space<vmem>>, vector<2x128xf32>
    %cst_41 = arith.constant dense<0.000000e+00> : vector<2x128xf32>
    %127 = tpu.matmul %124, %7, %cst_41 {dimension_numbers = #tpu.dot_dimension_numbers<[1], [0], [0], [1], [0, 0, 1, 1], [], []>} : vector<2x32xf32>, vector<32x128xf32>, vector<2x128xf32> -> vector<2x128xf32>
    %128 = arith.addf %126, %127 : vector<2x128xf32>
    %129 = vector.extract_strided_slice %128 {offsets = [0, 0], sizes = [2, 32], strides = [1, 1]} : vector<2x128xf32> to vector<2x32xf32>
    %130 = arith.negf %129 : vector<2x32xf32>
    %131 = math.exp %130 : vector<2x32xf32>
    %cst_42 = arith.constant 1.000000e+00 : f32
    %132 = vector.broadcast %cst_42 : f32 to vector<2x32xf32>
    %133 = arith.addf %132, %131 : vector<2x32xf32>
    %134 = arith.divf %132, %133 : vector<2x32xf32>
    %135 = vector.extract_strided_slice %128 {offsets = [0, 32], sizes = [2, 32], strides = [1, 1]} : vector<2x128xf32> to vector<2x32xf32>
    %136 = arith.negf %135 : vector<2x32xf32>
    %137 = math.exp %136 : vector<2x32xf32>
    %cst_43 = arith.constant 1.000000e+00 : f32
    %138 = vector.broadcast %cst_43 : f32 to vector<2x32xf32>
    %139 = arith.addf %138, %137 : vector<2x32xf32>
    %140 = arith.divf %138, %139 : vector<2x32xf32>
    %141 = vector.extract_strided_slice %128 {offsets = [0, 64], sizes = [2, 32], strides = [1, 1]} : vector<2x128xf32> to vector<2x32xf32>
    %142 = math.tanh %141 : vector<2x32xf32>
    %143 = vector.extract_strided_slice %128 {offsets = [0, 96], sizes = [2, 32], strides = [1, 1]} : vector<2x128xf32> to vector<2x32xf32>
    %144 = arith.negf %143 : vector<2x32xf32>
    %145 = math.exp %144 : vector<2x32xf32>
    %cst_44 = arith.constant 1.000000e+00 : f32
    %146 = vector.broadcast %cst_44 : f32 to vector<2x32xf32>
    %147 = arith.addf %146, %145 : vector<2x32xf32>
    %148 = arith.divf %146, %147 : vector<2x32xf32>
    %149 = arith.mulf %140, %122 : vector<2x32xf32>
    %150 = arith.mulf %134, %142 : vector<2x32xf32>
    %151 = arith.addf %149, %150 : vector<2x32xf32>
    %152 = math.tanh %151 : vector<2x32xf32>
    %153 = arith.mulf %148, %152 : vector<2x32xf32>
    %c8_45 = arith.constant 8 : index
    %c0_46 = arith.constant 0 : index
    %154 = vector.load %arg11[%c8_45, %c0_46] : memref<16x32xf32, #tpu.memory_space<vmem>>, vector<2x32xf32>
    tpu.vector_store %arg11[%c8_45, %c0_46], %153 {strides = array<i32>} : memref<16x32xf32, #tpu.memory_space<vmem>>, vector<2x32xf32>,
    %c10 = arith.constant 10 : index
    %c0_47 = arith.constant 0 : index
    %155 = vector.load %arg10[%c10, %c0_47] : memref<16x128xf32, #tpu.memory_space<vmem>>, vector<2x128xf32>
    %cst_48 = arith.constant dense<0.000000e+00> : vector<2x128xf32>
    %156 = tpu.matmul %153, %7, %cst_48 {dimension_numbers = #tpu.dot_dimension_numbers<[1], [0], [0], [1], [0, 0, 1, 1], [], []>} : vector<2x32xf32>, vector<32x128xf32>, vector<2x128xf32> -> vector<2x128xf32>
    %157 = arith.addf %155, %156 : vector<2x128xf32>
    %158 = vector.extract_strided_slice %157 {offsets = [0, 0], sizes = [2, 32], strides = [1, 1]} : vector<2x128xf32> to vector<2x32xf32>
    %159 = arith.negf %158 : vector<2x32xf32>
    %160 = math.exp %159 : vector<2x32xf32>
    %cst_49 = arith.constant 1.000000e+00 : f32
    %161 = vector.broadcast %cst_49 : f32 to vector<2x32xf32>
    %162 = arith.addf %161, %160 : vector<2x32xf32>
    %163 = arith.divf %161, %162 : vector<2x32xf32>
    %164 = vector.extract_strided_slice %157 {offsets = [0, 32], sizes = [2, 32], strides = [1, 1]} : vector<2x128xf32> to vector<2x32xf32>
    %165 = arith.negf %164 : vector<2x32xf32>
    %166 = math.exp %165 : vector<2x32xf32>
    %cst_50 = arith.constant 1.000000e+00 : f32
    %167 = vector.broadcast %cst_50 : f32 to vector<2x32xf32>
    %168 = arith.addf %167, %166 : vector<2x32xf32>
    %169 = arith.divf %167, %168 : vector<2x32xf32>
    %170 = vector.extract_strided_slice %157 {offsets = [0, 64], sizes = [2, 32], strides = [1, 1]} : vector<2x128xf32> to vector<2x32xf32>
    %171 = math.tanh %170 : vector<2x32xf32>
    %172 = vector.extract_strided_slice %157 {offsets = [0, 96], sizes = [2, 32], strides = [1, 1]} : vector<2x128xf32> to vector<2x32xf32>
    %173 = arith.negf %172 : vector<2x32xf32>
    %174 = math.exp %173 : vector<2x32xf32>
    %cst_51 = arith.constant 1.000000e+00 : f32
    %175 = vector.broadcast %cst_51 : f32 to vector<2x32xf32>
    %176 = arith.addf %175, %174 : vector<2x32xf32>
    %177 = arith.divf %175, %176 : vector<2x32xf32>
    %178 = arith.mulf %169, %151 : vector<2x32xf32>
    %179 = arith.mulf %163, %171 : vector<2x32xf32>
    %180 = arith.addf %178, %179 : vector<2x32xf32>
    %181 = math.tanh %180 : vector<2x32xf32>
    %182 = arith.mulf %177, %181 : vector<2x32xf32>
    %c10_52 = arith.constant 10 : index
    %c0_53 = arith.constant 0 : index
    %183 = vector.load %arg11[%c10_52, %c0_53] : memref<16x32xf32, #tpu.memory_space<vmem>>, vector<2x32xf32>
    tpu.vector_store %arg11[%c10_52, %c0_53], %182 {strides = array<i32>} : memref<16x32xf32, #tpu.memory_space<vmem>>, vector<2x32xf32>,
    %c12 = arith.constant 12 : index
    %c0_54 = arith.constant 0 : index
    %184 = vector.load %arg10[%c12, %c0_54] : memref<16x128xf32, #tpu.memory_space<vmem>>, vector<2x128xf32>
    %cst_55 = arith.constant dense<0.000000e+00> : vector<2x128xf32>
    %185 = tpu.matmul %182, %7, %cst_55 {dimension_numbers = #tpu.dot_dimension_numbers<[1], [0], [0], [1], [0, 0, 1, 1], [], []>} : vector<2x32xf32>, vector<32x128xf32>, vector<2x128xf32> -> vector<2x128xf32>
    %186 = arith.addf %184, %185 : vector<2x128xf32>
    %187 = vector.extract_strided_slice %186 {offsets = [0, 0], sizes = [2, 32], strides = [1, 1]} : vector<2x128xf32> to vector<2x32xf32>
    %188 = arith.negf %187 : vector<2x32xf32>
    %189 = math.exp %188 : vector<2x32xf32>
    %cst_56 = arith.constant 1.000000e+00 : f32
    %190 = vector.broadcast %cst_56 : f32 to vector<2x32xf32>
    %191 = arith.addf %190, %189 : vector<2x32xf32>
    %192 = arith.divf %190, %191 : vector<2x32xf32>
    %193 = vector.extract_strided_slice %186 {offsets = [0, 32], sizes = [2, 32], strides = [1, 1]} : vector<2x128xf32> to vector<2x32xf32>
    %194 = arith.negf %193 : vector<2x32xf32>
    %195 = math.exp %194 : vector<2x32xf32>
    %cst_57 = arith.constant 1.000000e+00 : f32
    %196 = vector.broadcast %cst_57 : f32 to vector<2x32xf32>
    %197 = arith.addf %196, %195 : vector<2x32xf32>
    %198 = arith.divf %196, %197 : vector<2x32xf32>
    %199 = vector.extract_strided_slice %186 {offsets = [0, 64], sizes = [2, 32], strides = [1, 1]} : vector<2x128xf32> to vector<2x32xf32>
    %200 = math.tanh %199 : vector<2x32xf32>
    %201 = vector.extract_strided_slice %186 {offsets = [0, 96], sizes = [2, 32], strides = [1, 1]} : vector<2x128xf32> to vector<2x32xf32>
    %202 = arith.negf %201 : vector<2x32xf32>
    %203 = math.exp %202 : vector<2x32xf32>
    %cst_58 = arith.constant 1.000000e+00 : f32
    %204 = vector.broadcast %cst_58 : f32 to vector<2x32xf32>
    %205 = arith.addf %204, %203 : vector<2x32xf32>
    %206 = arith.divf %204, %205 : vector<2x32xf32>
    %207 = arith.mulf %198, %180 : vector<2x32xf32>
    %208 = arith.mulf %192, %200 : vector<2x32xf32>
    %209 = arith.addf %207, %208 : vector<2x32xf32>
    %210 = math.tanh %209 : vector<2x32xf32>
    %211 = arith.mulf %206, %210 : vector<2x32xf32>
    %c12_59 = arith.constant 12 : index
    %c0_60 = arith.constant 0 : index
    %212 = vector.load %arg11[%c12_59, %c0_60] : memref<16x32xf32, #tpu.memory_space<vmem>>, vector<2x32xf32>
    tpu.vector_store %arg11[%c12_59, %c0_60], %211 {strides = array<i32>} : memref<16x32xf32, #tpu.memory_space<vmem>>, vector<2x32xf32>,
    %c14 = arith.constant 14 : index
    %c0_61 = arith.constant 0 : index
    %213 = vector.load %arg10[%c14, %c0_61] : memref<16x128xf32, #tpu.memory_space<vmem>>, vector<2x128xf32>
    %cst_62 = arith.constant dense<0.000000e+00> : vector<2x128xf32>
    %214 = tpu.matmul %211, %7, %cst_62 {dimension_numbers = #tpu.dot_dimension_numbers<[1], [0], [0], [1], [0, 0, 1, 1], [], []>} : vector<2x32xf32>, vector<32x128xf32>, vector<2x128xf32> -> vector<2x128xf32>
    %215 = arith.addf %213, %214 : vector<2x128xf32>
    %216 = vector.extract_strided_slice %215 {offsets = [0, 0], sizes = [2, 32], strides = [1, 1]} : vector<2x128xf32> to vector<2x32xf32>
    %217 = arith.negf %216 : vector<2x32xf32>
    %218 = math.exp %217 : vector<2x32xf32>
    %cst_63 = arith.constant 1.000000e+00 : f32
    %219 = vector.broadcast %cst_63 : f32 to vector<2x32xf32>
    %220 = arith.addf %219, %218 : vector<2x32xf32>
    %221 = arith.divf %219, %220 : vector<2x32xf32>
    %222 = vector.extract_strided_slice %215 {offsets = [0, 32], sizes = [2, 32], strides = [1, 1]} : vector<2x128xf32> to vector<2x32xf32>
    %223 = arith.negf %222 : vector<2x32xf32>
    %224 = math.exp %223 : vector<2x32xf32>
    %cst_64 = arith.constant 1.000000e+00 : f32
    %225 = vector.broadcast %cst_64 : f32 to vector<2x32xf32>
    %226 = arith.addf %225, %224 : vector<2x32xf32>
    %227 = arith.divf %225, %226 : vector<2x32xf32>
    %228 = vector.extract_strided_slice %215 {offsets = [0, 64], sizes = [2, 32], strides = [1, 1]} : vector<2x128xf32> to vector<2x32xf32>
    %229 = math.tanh %228 : vector<2x32xf32>
    %230 = vector.extract_strided_slice %215 {offsets = [0, 96], sizes = [2, 32], strides = [1, 1]} : vector<2x128xf32> to vector<2x32xf32>
    %231 = arith.negf %230 : vector<2x32xf32>
    %232 = math.exp %231 : vector<2x32xf32>
    %cst_65 = arith.constant 1.000000e+00 : f32
    %233 = vector.broadcast %cst_65 : f32 to vector<2x32xf32>
    %234 = arith.addf %233, %232 : vector<2x32xf32>
    %235 = arith.divf %233, %234 : vector<2x32xf32>
    %236 = arith.mulf %227, %209 : vector<2x32xf32>
    %237 = arith.mulf %221, %229 : vector<2x32xf32>
    %238 = arith.addf %236, %237 : vector<2x32xf32>
    %239 = math.tanh %238 : vector<2x32xf32>
    %240 = arith.mulf %235, %239 : vector<2x32xf32>
    %c14_66 = arith.constant 14 : index
    %c0_67 = arith.constant 0 : index
    %241 = vector.load %arg11[%c14_66, %c0_67] : memref<16x32xf32, #tpu.memory_space<vmem>>, vector<2x32xf32>
    tpu.vector_store %arg11[%c14_66, %c0_67], %240 {strides = array<i32>} : memref<16x32xf32, #tpu.memory_space<vmem>>, vector<2x32xf32>,
    %c0_68 = arith.constant 0 : index
    %c0_69 = arith.constant 0 : index
    %242 = vector.load %arg11[%c0_68, %c0_69] : memref<16x32xf32, #tpu.memory_space<vmem>>, vector<16x32xf32>
    %c0_70 = arith.constant 0 : index
    %c0_71 = arith.constant 0 : index
    %243 = vector.load %arg4[%c0_70, %c0_71] : memref<32x128xf32, #tpu.memory_space<vmem>>, vector<32x128xf32>
    %cst_72 = arith.constant dense<0.000000e+00> : vector<16x128xf32>
    %244 = tpu.matmul %242, %243, %cst_72 {dimension_numbers = #tpu.dot_dimension_numbers<[1], [0], [0], [1], [0, 0, 1, 1], [], []>} : vector<16x32xf32>, vector<32x128xf32>, vector<16x128xf32> -> vector<16x128xf32>
    %c0_73 = arith.constant 0 : index
    %c0_74 = arith.constant 0 : index
    %245 = vector.load %arg6[%c0_73, %c0_74] : memref<1x128xf32, #tpu.memory_space<vmem>>, vector<1x128xf32>
    %246 = vector.broadcast %245 : vector<1x128xf32> to vector<16x128xf32>
    %247 = arith.addf %244, %246 : vector<16x128xf32>
    %c0_75 = arith.constant 0 : index
    %c0_76 = arith.constant 0 : index
    %248 = vector.load %arg10[%c0_75, %c0_76] : memref<16x128xf32, #tpu.memory_space<vmem>>, vector<16x128xf32>
    tpu.vector_store %arg10[%c0_75, %c0_76], %247 {strides = array<i32>} : memref<16x128xf32, #tpu.memory_space<vmem>>, vector<16x128xf32>,
    %c0_77 = arith.constant 0 : index
    %c0_78 = arith.constant 0 : index
    %249 = vector.load %arg5[%c0_77, %c0_78] : memref<32x128xf32, #tpu.memory_space<vmem>>, vector<32x128xf32>
    %cst_79 = arith.constant 0.000000e+00 : f32
    %250 = vector.broadcast %cst_79 : f32 to vector<2x32xf32>
    %cst_80 = arith.constant 0.000000e+00 : f32
    %251 = vector.broadcast %cst_80 : f32 to vector<2x32xf32>
    %c0_81 = arith.constant 0 : index
    %c0_82 = arith.constant 0 : index
    %252 = vector.load %arg10[%c0_81, %c0_82] : memref<16x128xf32, #tpu.memory_space<vmem>>, vector<2x128xf32>
    %cst_83 = arith.constant dense<0.000000e+00> : vector<2x128xf32>
    %253 = tpu.matmul %250, %249, %cst_83 {dimension_numbers = #tpu.dot_dimension_numbers<[1], [0], [0], [1], [0, 0, 1, 1], [], []>} : vector<2x32xf32>, vector<32x128xf32>, vector<2x128xf32> -> vector<2x128xf32>
    %254 = arith.addf %252, %253 : vector<2x128xf32>
    %255 = vector.extract_strided_slice %254 {offsets = [0, 0], sizes = [2, 32], strides = [1, 1]} : vector<2x128xf32> to vector<2x32xf32>
    %256 = arith.negf %255 : vector<2x32xf32>
    %257 = math.exp %256 : vector<2x32xf32>
    %cst_84 = arith.constant 1.000000e+00 : f32
    %258 = vector.broadcast %cst_84 : f32 to vector<2x32xf32>
    %259 = arith.addf %258, %257 : vector<2x32xf32>
    %260 = arith.divf %258, %259 : vector<2x32xf32>
    %261 = vector.extract_strided_slice %254 {offsets = [0, 32], sizes = [2, 32], strides = [1, 1]} : vector<2x128xf32> to vector<2x32xf32>
    %262 = arith.negf %261 : vector<2x32xf32>
    %263 = math.exp %262 : vector<2x32xf32>
    %cst_85 = arith.constant 1.000000e+00 : f32
    %264 = vector.broadcast %cst_85 : f32 to vector<2x32xf32>
    %265 = arith.addf %264, %263 : vector<2x32xf32>
    %266 = arith.divf %264, %265 : vector<2x32xf32>
    %267 = vector.extract_strided_slice %254 {offsets = [0, 64], sizes = [2, 32], strides = [1, 1]} : vector<2x128xf32> to vector<2x32xf32>
    %268 = math.tanh %267 : vector<2x32xf32>
    %269 = vector.extract_strided_slice %254 {offsets = [0, 96], sizes = [2, 32], strides = [1, 1]} : vector<2x128xf32> to vector<2x32xf32>
    %270 = arith.negf %269 : vector<2x32xf32>
    %271 = math.exp %270 : vector<2x32xf32>
    %cst_86 = arith.constant 1.000000e+00 : f32
    %272 = vector.broadcast %cst_86 : f32 to vector<2x32xf32>
    %273 = arith.addf %272, %271 : vector<2x32xf32>
    %274 = arith.divf %272, %273 : vector<2x32xf32>
    %275 = arith.mulf %266, %251 : vector<2x32xf32>
    %276 = arith.mulf %260, %268 : vector<2x32xf32>
    %277 = arith.addf %275, %276 : vector<2x32xf32>
    %278 = math.tanh %277 : vector<2x32xf32>
    %279 = arith.mulf %274, %278 : vector<2x32xf32>
    %c0_87 = arith.constant 0 : index
    %c0_88 = arith.constant 0 : index
    %280 = vector.load %arg11[%c0_87, %c0_88] : memref<16x32xf32, #tpu.memory_space<vmem>>, vector<2x32xf32>
    tpu.vector_store %arg11[%c0_87, %c0_88], %279 {strides = array<i32>} : memref<16x32xf32, #tpu.memory_space<vmem>>, vector<2x32xf32>,
    %c2_89 = arith.constant 2 : index
    %c0_90 = arith.constant 0 : index
    %281 = vector.load %arg10[%c2_89, %c0_90] : memref<16x128xf32, #tpu.memory_space<vmem>>, vector<2x128xf32>
    %cst_91 = arith.constant dense<0.000000e+00> : vector<2x128xf32>
    %282 = tpu.matmul %279, %249, %cst_91 {dimension_numbers = #tpu.dot_dimension_numbers<[1], [0], [0], [1], [0, 0, 1, 1], [], []>} : vector<2x32xf32>, vector<32x128xf32>, vector<2x128xf32> -> vector<2x128xf32>
    %283 = arith.addf %281, %282 : vector<2x128xf32>
    %284 = vector.extract_strided_slice %283 {offsets = [0, 0], sizes = [2, 32], strides = [1, 1]} : vector<2x128xf32> to vector<2x32xf32>
    %285 = arith.negf %284 : vector<2x32xf32>
    %286 = math.exp %285 : vector<2x32xf32>
    %cst_92 = arith.constant 1.000000e+00 : f32
    %287 = vector.broadcast %cst_92 : f32 to vector<2x32xf32>
    %288 = arith.addf %287, %286 : vector<2x32xf32>
    %289 = arith.divf %287, %288 : vector<2x32xf32>
    %290 = vector.extract_strided_slice %283 {offsets = [0, 32], sizes = [2, 32], strides = [1, 1]} : vector<2x128xf32> to vector<2x32xf32>
    %291 = arith.negf %290 : vector<2x32xf32>
    %292 = math.exp %291 : vector<2x32xf32>
    %cst_93 = arith.constant 1.000000e+00 : f32
    %293 = vector.broadcast %cst_93 : f32 to vector<2x32xf32>
    %294 = arith.addf %293, %292 : vector<2x32xf32>
    %295 = arith.divf %293, %294 : vector<2x32xf32>
    %296 = vector.extract_strided_slice %283 {offsets = [0, 64], sizes = [2, 32], strides = [1, 1]} : vector<2x128xf32> to vector<2x32xf32>
    %297 = math.tanh %296 : vector<2x32xf32>
    %298 = vector.extract_strided_slice %283 {offsets = [0, 96], sizes = [2, 32], strides = [1, 1]} : vector<2x128xf32> to vector<2x32xf32>
    %299 = arith.negf %298 : vector<2x32xf32>
    %300 = math.exp %299 : vector<2x32xf32>
    %cst_94 = arith.constant 1.000000e+00 : f32
    %301 = vector.broadcast %cst_94 : f32 to vector<2x32xf32>
    %302 = arith.addf %301, %300 : vector<2x32xf32>
    %303 = arith.divf %301, %302 : vector<2x32xf32>
    %304 = arith.mulf %295, %277 : vector<2x32xf32>
    %305 = arith.mulf %289, %297 : vector<2x32xf32>
    %306 = arith.addf %304, %305 : vector<2x32xf32>
    %307 = math.tanh %306 : vector<2x32xf32>
    %308 = arith.mulf %303, %307 : vector<2x32xf32>
    %c2_95 = arith.constant 2 : index
    %c0_96 = arith.constant 0 : index
    %309 = vector.load %arg11[%c2_95, %c0_96] : memref<16x32xf32, #tpu.memory_space<vmem>>, vector<2x32xf32>
    tpu.vector_store %arg11[%c2_95, %c0_96], %308 {strides = array<i32>} : memref<16x32xf32, #tpu.memory_space<vmem>>, vector<2x32xf32>,
    %c4_97 = arith.constant 4 : index
    %c0_98 = arith.constant 0 : index
    %310 = vector.load %arg10[%c4_97, %c0_98] : memref<16x128xf32, #tpu.memory_space<vmem>>, vector<2x128xf32>
    %cst_99 = arith.constant dense<0.000000e+00> : vector<2x128xf32>
    %311 = tpu.matmul %308, %249, %cst_99 {dimension_numbers = #tpu.dot_dimension_numbers<[1], [0], [0], [1], [0, 0, 1, 1], [], []>} : vector<2x32xf32>, vector<32x128xf32>, vector<2x128xf32> -> vector<2x128xf32>
    %312 = arith.addf %310, %311 : vector<2x128xf32>
    %313 = vector.extract_strided_slice %312 {offsets = [0, 0], sizes = [2, 32], strides = [1, 1]} : vector<2x128xf32> to vector<2x32xf32>
    %314 = arith.negf %313 : vector<2x32xf32>
    %315 = math.exp %314 : vector<2x32xf32>
    %cst_100 = arith.constant 1.000000e+00 : f32
    %316 = vector.broadcast %cst_100 : f32 to vector<2x32xf32>
    %317 = arith.addf %316, %315 : vector<2x32xf32>
    %318 = arith.divf %316, %317 : vector<2x32xf32>
    %319 = vector.extract_strided_slice %312 {offsets = [0, 32], sizes = [2, 32], strides = [1, 1]} : vector<2x128xf32> to vector<2x32xf32>
    %320 = arith.negf %319 : vector<2x32xf32>
    %321 = math.exp %320 : vector<2x32xf32>
    %cst_101 = arith.constant 1.000000e+00 : f32
    %322 = vector.broadcast %cst_101 : f32 to vector<2x32xf32>
    %323 = arith.addf %322, %321 : vector<2x32xf32>
    %324 = arith.divf %322, %323 : vector<2x32xf32>
    %325 = vector.extract_strided_slice %312 {offsets = [0, 64], sizes = [2, 32], strides = [1, 1]} : vector<2x128xf32> to vector<2x32xf32>
    %326 = math.tanh %325 : vector<2x32xf32>
    %327 = vector.extract_strided_slice %312 {offsets = [0, 96], sizes = [2, 32], strides = [1, 1]} : vector<2x128xf32> to vector<2x32xf32>
    %328 = arith.negf %327 : vector<2x32xf32>
    %329 = math.exp %328 : vector<2x32xf32>
    %cst_102 = arith.constant 1.000000e+00 : f32
    %330 = vector.broadcast %cst_102 : f32 to vector<2x32xf32>
    %331 = arith.addf %330, %329 : vector<2x32xf32>
    %332 = arith.divf %330, %331 : vector<2x32xf32>
    %333 = arith.mulf %324, %306 : vector<2x32xf32>
    %334 = arith.mulf %318, %326 : vector<2x32xf32>
    %335 = arith.addf %333, %334 : vector<2x32xf32>
    %336 = math.tanh %335 : vector<2x32xf32>
    %337 = arith.mulf %332, %336 : vector<2x32xf32>
    %c4_103 = arith.constant 4 : index
    %c0_104 = arith.constant 0 : index
    %338 = vector.load %arg11[%c4_103, %c0_104] : memref<16x32xf32, #tpu.memory_space<vmem>>, vector<2x32xf32>
    tpu.vector_store %arg11[%c4_103, %c0_104], %337 {strides = array<i32>} : memref<16x32xf32, #tpu.memory_space<vmem>>, vector<2x32xf32>,
    %c6_105 = arith.constant 6 : index
    %c0_106 = arith.constant 0 : index
    %339 = vector.load %arg10[%c6_105, %c0_106] : memref<16x128xf32, #tpu.memory_space<vmem>>, vector<2x128xf32>
    %cst_107 = arith.constant dense<0.000000e+00> : vector<2x128xf32>
    %340 = tpu.matmul %337, %249, %cst_107 {dimension_numbers = #tpu.dot_dimension_numbers<[1], [0], [0], [1], [0, 0, 1, 1], [], []>} : vector<2x32xf32>, vector<32x128xf32>, vector<2x128xf32> -> vector<2x128xf32>
    %341 = arith.addf %339, %340 : vector<2x128xf32>
    %342 = vector.extract_strided_slice %341 {offsets = [0, 0], sizes = [2, 32], strides = [1, 1]} : vector<2x128xf32> to vector<2x32xf32>
    %343 = arith.negf %342 : vector<2x32xf32>
    %344 = math.exp %343 : vector<2x32xf32>
    %cst_108 = arith.constant 1.000000e+00 : f32
    %345 = vector.broadcast %cst_108 : f32 to vector<2x32xf32>
    %346 = arith.addf %345, %344 : vector<2x32xf32>
    %347 = arith.divf %345, %346 : vector<2x32xf32>
    %348 = vector.extract_strided_slice %341 {offsets = [0, 32], sizes = [2, 32], strides = [1, 1]} : vector<2x128xf32> to vector<2x32xf32>
    %349 = arith.negf %348 : vector<2x32xf32>
    %350 = math.exp %349 : vector<2x32xf32>
    %cst_109 = arith.constant 1.000000e+00 : f32
    %351 = vector.broadcast %cst_109 : f32 to vector<2x32xf32>
    %352 = arith.addf %351, %350 : vector<2x32xf32>
    %353 = arith.divf %351, %352 : vector<2x32xf32>
    %354 = vector.extract_strided_slice %341 {offsets = [0, 64], sizes = [2, 32], strides = [1, 1]} : vector<2x128xf32> to vector<2x32xf32>
    %355 = math.tanh %354 : vector<2x32xf32>
    %356 = vector.extract_strided_slice %341 {offsets = [0, 96], sizes = [2, 32], strides = [1, 1]} : vector<2x128xf32> to vector<2x32xf32>
    %357 = arith.negf %356 : vector<2x32xf32>
    %358 = math.exp %357 : vector<2x32xf32>
    %cst_110 = arith.constant 1.000000e+00 : f32
    %359 = vector.broadcast %cst_110 : f32 to vector<2x32xf32>
    %360 = arith.addf %359, %358 : vector<2x32xf32>
    %361 = arith.divf %359, %360 : vector<2x32xf32>
    %362 = arith.mulf %353, %335 : vector<2x32xf32>
    %363 = arith.mulf %347, %355 : vector<2x32xf32>
    %364 = arith.addf %362, %363 : vector<2x32xf32>
    %365 = math.tanh %364 : vector<2x32xf32>
    %366 = arith.mulf %361, %365 : vector<2x32xf32>
    %c6_111 = arith.constant 6 : index
    %c0_112 = arith.constant 0 : index
    %367 = vector.load %arg11[%c6_111, %c0_112] : memref<16x32xf32, #tpu.memory_space<vmem>>, vector<2x32xf32>
    tpu.vector_store %arg11[%c6_111, %c0_112], %366 {strides = array<i32>} : memref<16x32xf32, #tpu.memory_space<vmem>>, vector<2x32xf32>,
    %c8_113 = arith.constant 8 : index
    %c0_114 = arith.constant 0 : index
    %368 = vector.load %arg10[%c8_113, %c0_114] : memref<16x128xf32, #tpu.memory_space<vmem>>, vector<2x128xf32>
    %cst_115 = arith.constant dense<0.000000e+00> : vector<2x128xf32>
    %369 = tpu.matmul %366, %249, %cst_115 {dimension_numbers = #tpu.dot_dimension_numbers<[1], [0], [0], [1], [0, 0, 1, 1], [], []>} : vector<2x32xf32>, vector<32x128xf32>, vector<2x128xf32> -> vector<2x128xf32>
    %370 = arith.addf %368, %369 : vector<2x128xf32>
    %371 = vector.extract_strided_slice %370 {offsets = [0, 0], sizes = [2, 32], strides = [1, 1]} : vector<2x128xf32> to vector<2x32xf32>
    %372 = arith.negf %371 : vector<2x32xf32>
    %373 = math.exp %372 : vector<2x32xf32>
    %cst_116 = arith.constant 1.000000e+00 : f32
    %374 = vector.broadcast %cst_116 : f32 to vector<2x32xf32>
    %375 = arith.addf %374, %373 : vector<2x32xf32>
    %376 = arith.divf %374, %375 : vector<2x32xf32>
    %377 = vector.extract_strided_slice %370 {offsets = [0, 32], sizes = [2, 32], strides = [1, 1]} : vector<2x128xf32> to vector<2x32xf32>
    %378 = arith.negf %377 : vector<2x32xf32>
    %379 = math.exp %378 : vector<2x32xf32>
    %cst_117 = arith.constant 1.000000e+00 : f32
    %380 = vector.broadcast %cst_117 : f32 to vector<2x32xf32>
    %381 = arith.addf %380, %379 : vector<2x32xf32>
    %382 = arith.divf %380, %381 : vector<2x32xf32>
    %383 = vector.extract_strided_slice %370 {offsets = [0, 64], sizes = [2, 32], strides = [1, 1]} : vector<2x128xf32> to vector<2x32xf32>
    %384 = math.tanh %383 : vector<2x32xf32>
    %385 = vector.extract_strided_slice %370 {offsets = [0, 96], sizes = [2, 32], strides = [1, 1]} : vector<2x128xf32> to vector<2x32xf32>
    %386 = arith.negf %385 : vector<2x32xf32>
    %387 = math.exp %386 : vector<2x32xf32>
    %cst_118 = arith.constant 1.000000e+00 : f32
    %388 = vector.broadcast %cst_118 : f32 to vector<2x32xf32>
    %389 = arith.addf %388, %387 : vector<2x32xf32>
    %390 = arith.divf %388, %389 : vector<2x32xf32>
    %391 = arith.mulf %382, %364 : vector<2x32xf32>
    %392 = arith.mulf %376, %384 : vector<2x32xf32>
    %393 = arith.addf %391, %392 : vector<2x32xf32>
    %394 = math.tanh %393 : vector<2x32xf32>
    %395 = arith.mulf %390, %394 : vector<2x32xf32>
    %c8_119 = arith.constant 8 : index
    %c0_120 = arith.constant 0 : index
    %396 = vector.load %arg11[%c8_119, %c0_120] : memref<16x32xf32, #tpu.memory_space<vmem>>, vector<2x32xf32>
    tpu.vector_store %arg11[%c8_119, %c0_120], %395 {strides = array<i32>} : memref<16x32xf32, #tpu.memory_space<vmem>>, vector<2x32xf32>,
    %c10_121 = arith.constant 10 : index
    %c0_122 = arith.constant 0 : index
    %397 = vector.load %arg10[%c10_121, %c0_122] : memref<16x128xf32, #tpu.memory_space<vmem>>, vector<2x128xf32>
    %cst_123 = arith.constant dense<0.000000e+00> : vector<2x128xf32>
    %398 = tpu.matmul %395, %249, %cst_123 {dimension_numbers = #tpu.dot_dimension_numbers<[1], [0], [0], [1], [0, 0, 1, 1], [], []>} : vector<2x32xf32>, vector<32x128xf32>, vector<2x128xf32> -> vector<2x128xf32>
    %399 = arith.addf %397, %398 : vector<2x128xf32>
    %400 = vector.extract_strided_slice %399 {offsets = [0, 0], sizes = [2, 32], strides = [1, 1]} : vector<2x128xf32> to vector<2x32xf32>
    %401 = arith.negf %400 : vector<2x32xf32>
    %402 = math.exp %401 : vector<2x32xf32>
    %cst_124 = arith.constant 1.000000e+00 : f32
    %403 = vector.broadcast %cst_124 : f32 to vector<2x32xf32>
    %404 = arith.addf %403, %402 : vector<2x32xf32>
    %405 = arith.divf %403, %404 : vector<2x32xf32>
    %406 = vector.extract_strided_slice %399 {offsets = [0, 32], sizes = [2, 32], strides = [1, 1]} : vector<2x128xf32> to vector<2x32xf32>
    %407 = arith.negf %406 : vector<2x32xf32>
    %408 = math.exp %407 : vector<2x32xf32>
    %cst_125 = arith.constant 1.000000e+00 : f32
    %409 = vector.broadcast %cst_125 : f32 to vector<2x32xf32>
    %410 = arith.addf %409, %408 : vector<2x32xf32>
    %411 = arith.divf %409, %410 : vector<2x32xf32>
    %412 = vector.extract_strided_slice %399 {offsets = [0, 64], sizes = [2, 32], strides = [1, 1]} : vector<2x128xf32> to vector<2x32xf32>
    %413 = math.tanh %412 : vector<2x32xf32>
    %414 = vector.extract_strided_slice %399 {offsets = [0, 96], sizes = [2, 32], strides = [1, 1]} : vector<2x128xf32> to vector<2x32xf32>
    %415 = arith.negf %414 : vector<2x32xf32>
    %416 = math.exp %415 : vector<2x32xf32>
    %cst_126 = arith.constant 1.000000e+00 : f32
    %417 = vector.broadcast %cst_126 : f32 to vector<2x32xf32>
    %418 = arith.addf %417, %416 : vector<2x32xf32>
    %419 = arith.divf %417, %418 : vector<2x32xf32>
    %420 = arith.mulf %411, %393 : vector<2x32xf32>
    %421 = arith.mulf %405, %413 : vector<2x32xf32>
    %422 = arith.addf %420, %421 : vector<2x32xf32>
    %423 = math.tanh %422 : vector<2x32xf32>
    %424 = arith.mulf %419, %423 : vector<2x32xf32>
    %c10_127 = arith.constant 10 : index
    %c0_128 = arith.constant 0 : index
    %425 = vector.load %arg11[%c10_127, %c0_128] : memref<16x32xf32, #tpu.memory_space<vmem>>, vector<2x32xf32>
    tpu.vector_store %arg11[%c10_127, %c0_128], %424 {strides = array<i32>} : memref<16x32xf32, #tpu.memory_space<vmem>>, vector<2x32xf32>,
    %c12_129 = arith.constant 12 : index
    %c0_130 = arith.constant 0 : index
    %426 = vector.load %arg10[%c12_129, %c0_130] : memref<16x128xf32, #tpu.memory_space<vmem>>, vector<2x128xf32>
    %cst_131 = arith.constant dense<0.000000e+00> : vector<2x128xf32>
    %427 = tpu.matmul %424, %249, %cst_131 {dimension_numbers = #tpu.dot_dimension_numbers<[1], [0], [0], [1], [0, 0, 1, 1], [], []>} : vector<2x32xf32>, vector<32x128xf32>, vector<2x128xf32> -> vector<2x128xf32>
    %428 = arith.addf %426, %427 : vector<2x128xf32>
    %429 = vector.extract_strided_slice %428 {offsets = [0, 0], sizes = [2, 32], strides = [1, 1]} : vector<2x128xf32> to vector<2x32xf32>
    %430 = arith.negf %429 : vector<2x32xf32>
    %431 = math.exp %430 : vector<2x32xf32>
    %cst_132 = arith.constant 1.000000e+00 : f32
    %432 = vector.broadcast %cst_132 : f32 to vector<2x32xf32>
    %433 = arith.addf %432, %431 : vector<2x32xf32>
    %434 = arith.divf %432, %433 : vector<2x32xf32>
    %435 = vector.extract_strided_slice %428 {offsets = [0, 32], sizes = [2, 32], strides = [1, 1]} : vector<2x128xf32> to vector<2x32xf32>
    %436 = arith.negf %435 : vector<2x32xf32>
    %437 = math.exp %436 : vector<2x32xf32>
    %cst_133 = arith.constant 1.000000e+00 : f32
    %438 = vector.broadcast %cst_133 : f32 to vector<2x32xf32>
    %439 = arith.addf %438, %437 : vector<2x32xf32>
    %440 = arith.divf %438, %439 : vector<2x32xf32>
    %441 = vector.extract_strided_slice %428 {offsets = [0, 64], sizes = [2, 32], strides = [1, 1]} : vector<2x128xf32> to vector<2x32xf32>
    %442 = math.tanh %441 : vector<2x32xf32>
    %443 = vector.extract_strided_slice %428 {offsets = [0, 96], sizes = [2, 32], strides = [1, 1]} : vector<2x128xf32> to vector<2x32xf32>
    %444 = arith.negf %443 : vector<2x32xf32>
    %445 = math.exp %444 : vector<2x32xf32>
    %cst_134 = arith.constant 1.000000e+00 : f32
    %446 = vector.broadcast %cst_134 : f32 to vector<2x32xf32>
    %447 = arith.addf %446, %445 : vector<2x32xf32>
    %448 = arith.divf %446, %447 : vector<2x32xf32>
    %449 = arith.mulf %440, %422 : vector<2x32xf32>
    %450 = arith.mulf %434, %442 : vector<2x32xf32>
    %451 = arith.addf %449, %450 : vector<2x32xf32>
    %452 = math.tanh %451 : vector<2x32xf32>
    %453 = arith.mulf %448, %452 : vector<2x32xf32>
    %c12_135 = arith.constant 12 : index
    %c0_136 = arith.constant 0 : index
    %454 = vector.load %arg11[%c12_135, %c0_136] : memref<16x32xf32, #tpu.memory_space<vmem>>, vector<2x32xf32>
    tpu.vector_store %arg11[%c12_135, %c0_136], %453 {strides = array<i32>} : memref<16x32xf32, #tpu.memory_space<vmem>>, vector<2x32xf32>,
    %c14_137 = arith.constant 14 : index
    %c0_138 = arith.constant 0 : index
    %455 = vector.load %arg10[%c14_137, %c0_138] : memref<16x128xf32, #tpu.memory_space<vmem>>, vector<2x128xf32>
    %cst_139 = arith.constant dense<0.000000e+00> : vector<2x128xf32>
    %456 = tpu.matmul %453, %249, %cst_139 {dimension_numbers = #tpu.dot_dimension_numbers<[1], [0], [0], [1], [0, 0, 1, 1], [], []>} : vector<2x32xf32>, vector<32x128xf32>, vector<2x128xf32> -> vector<2x128xf32>
    %457 = arith.addf %455, %456 : vector<2x128xf32>
    %458 = vector.extract_strided_slice %457 {offsets = [0, 0], sizes = [2, 32], strides = [1, 1]} : vector<2x128xf32> to vector<2x32xf32>
    %459 = arith.negf %458 : vector<2x32xf32>
    %460 = math.exp %459 : vector<2x32xf32>
    %cst_140 = arith.constant 1.000000e+00 : f32
    %461 = vector.broadcast %cst_140 : f32 to vector<2x32xf32>
    %462 = arith.addf %461, %460 : vector<2x32xf32>
    %463 = arith.divf %461, %462 : vector<2x32xf32>
    %464 = vector.extract_strided_slice %457 {offsets = [0, 32], sizes = [2, 32], strides = [1, 1]} : vector<2x128xf32> to vector<2x32xf32>
    %465 = arith.negf %464 : vector<2x32xf32>
    %466 = math.exp %465 : vector<2x32xf32>
    %cst_141 = arith.constant 1.000000e+00 : f32
    %467 = vector.broadcast %cst_141 : f32 to vector<2x32xf32>
    %468 = arith.addf %467, %466 : vector<2x32xf32>
    %469 = arith.divf %467, %468 : vector<2x32xf32>
    %470 = vector.extract_strided_slice %457 {offsets = [0, 64], sizes = [2, 32], strides = [1, 1]} : vector<2x128xf32> to vector<2x32xf32>
    %471 = math.tanh %470 : vector<2x32xf32>
    %472 = vector.extract_strided_slice %457 {offsets = [0, 96], sizes = [2, 32], strides = [1, 1]} : vector<2x128xf32> to vector<2x32xf32>
    %473 = arith.negf %472 : vector<2x32xf32>
    %474 = math.exp %473 : vector<2x32xf32>
    %cst_142 = arith.constant 1.000000e+00 : f32
    %475 = vector.broadcast %cst_142 : f32 to vector<2x32xf32>
    %476 = arith.addf %475, %474 : vector<2x32xf32>
    %477 = arith.divf %475, %476 : vector<2x32xf32>
    %478 = arith.mulf %469, %451 : vector<2x32xf32>
    %479 = arith.mulf %463, %471 : vector<2x32xf32>
    %480 = arith.addf %478, %479 : vector<2x32xf32>
    %481 = math.tanh %480 : vector<2x32xf32>
    %482 = arith.mulf %477, %481 : vector<2x32xf32>
    %c14_143 = arith.constant 14 : index
    %c0_144 = arith.constant 0 : index
    %483 = vector.load %arg11[%c14_143, %c0_144] : memref<16x32xf32, #tpu.memory_space<vmem>>, vector<2x32xf32>
    tpu.vector_store %arg11[%c14_143, %c0_144], %482 {strides = array<i32>} : memref<16x32xf32, #tpu.memory_space<vmem>>, vector<2x32xf32>,
    %c0_145 = arith.constant 0 : index
    %c0_146 = arith.constant 0 : index
    %484 = vector.load %arg11[%c0_145, %c0_146] : memref<16x32xf32, #tpu.memory_space<vmem>>, vector<16x32xf32>
    %c0_147 = arith.constant 0 : index
    %c0_148 = arith.constant 0 : index
    %485 = vector.load %arg7[%c0_147, %c0_148] : memref<32x128xf32, #tpu.memory_space<vmem>>, vector<32x128xf32>
    %cst_149 = arith.constant dense<0.000000e+00> : vector<16x128xf32>
    %486 = tpu.matmul %484, %485, %cst_149 {dimension_numbers = #tpu.dot_dimension_numbers<[1], [0], [0], [1], [0, 0, 1, 1], [], []>} : vector<16x32xf32>, vector<32x128xf32>, vector<16x128xf32> -> vector<16x128xf32>
    %c0_150 = arith.constant 0 : index
    %c0_151 = arith.constant 0 : index
    %487 = vector.load %arg8[%c0_150, %c0_151] : memref<1x128xf32, #tpu.memory_space<vmem>>, vector<1x128xf32>
    %488 = vector.broadcast %487 : vector<1x128xf32> to vector<16x128xf32>
    %489 = arith.addf %486, %488 : vector<16x128xf32>
    %c0_152 = arith.constant 0 : index
    %c0_153 = arith.constant 0 : index
    %490 = vector.load %arg9[%c0_152, %c0_153] : memref<16x128xf32, #tpu.memory_space<vmem>>, vector<16x128xf32>
    tpu.vector_store %arg9[%c0_152, %c0_153], %489 {strides = array<i32>} : memref<16x128xf32, #tpu.memory_space<vmem>>, vector<16x128xf32>,
    return
  }
}

</mosaic_0001>

<llo_original>
// kernel: lstm_model_forward.1
$region0: #{lstm_model_forward.1}
  #allocation0 [shape = 'u32[]', space=smem, size = 0x4, offset = 0x4, fixed_abs, tag = 'smem constant byte address 0x4 - core index']
  #allocation1 [shape = 'u32[144,128]{1,0:T(1,128)}', space=vmem, size = 0x12000, scoped, tag = 'internal scratch']
  #allocation2 [shape = 'f32[16,128]{1,0:T(8,128)}', space=vmem, size = 0x2000, scoped, tag = 'scratch operand']
  #allocation3 [shape = 'f32[16,32]{1,0:T(8,128)}', space=vmem, size = 0x2000, scoped, tag = 'scratch operand']
  %s0 = inlined_call_operand.vmem [shape: f32[16,16], index: 0, kind: input, shape index: {}]
  %s1 = inlined_call_operand.vmem [shape: f32[16,128], index: 1, kind: input, shape index: {}]
  %s2 = inlined_call_operand.vmem [shape: f32[32,128], index: 2, kind: input, shape index: {}]
  %s3 = inlined_call_operand.vmem [shape: f32[1,128], index: 3, kind: input, shape index: {}]
  %s4 = inlined_call_operand.vmem [shape: f32[32,128], index: 4, kind: input, shape index: {}]
  %s5 = inlined_call_operand.vmem [shape: f32[32,128], index: 5, kind: input, shape index: {}]
  %s6 = inlined_call_operand.vmem [shape: f32[1,128], index: 6, kind: input, shape index: {}]
  %s7 = inlined_call_operand.vmem [shape: f32[32,128], index: 7, kind: input, shape index: {}]
  %s8 = inlined_call_operand.vmem [shape: f32[1,128], index: 8, kind: input, shape index: {}]
  %s9 = inlined_call_operand.vmem [shape: f32[16,128], index: 9, kind: output, shape index: {}]
  %s10 = sld [smem:[#allocation0]]
  $region46: #{lstm_model_forward.1} parent=0
    _
  %s12 = ssub.s32 1, %s10
  %s13 = scalar_select 0, %s12, %s10
  // Predicated region
  $region2: #{lstm_model_forward.1} parent=0 // pred_check
    _
  $region3: #{lstm_model_forward.1} parent=0 // pred_check_branch
    %15 = sbr.rel (0) target = $region5
  $region4: #{lstm_model_forward.1} parent=0 // pred_region
    _
  $region5: #{lstm_model_forward.1} parent=0 // pred_fallthru
    _
  // Predicated region
  $region6: #{lstm_model_forward.1} parent=0 // pred_check
    _
  $region7: #{lstm_model_forward.1} parent=0 // pred_check_branch
    %17 = sbr.rel (0) target = $region9
  $region8: #{lstm_model_forward.1} parent=0 // pred_region
    _
  $region9: #{lstm_model_forward.1} parent=0 // pred_fallthru
    _
  // Predicated region
  $region10: #{lstm_model_forward.1} parent=0 // pred_check
    _
  $region11: #{lstm_model_forward.1} parent=0 // pred_check_branch
    %19 = sbr.rel (0) target = $region13
  $region12: #{lstm_model_forward.1} parent=0 // pred_region
    _
  $region13: #{lstm_model_forward.1} parent=0 // pred_fallthru
    _
  // Predicated region
  $region14: #{lstm_model_forward.1} parent=0 // pred_check
    _
  $region15: #{lstm_model_forward.1} parent=0 // pred_check_branch
    %21 = sbr.rel (0) target = $region17
  $region16: #{lstm_model_forward.1} parent=0 // pred_region
    _
  $region17: #{lstm_model_forward.1} parent=0 // pred_fallthru
    _
  // Predicated region
  $region18: #{lstm_model_forward.1} parent=0 // pred_check
    _
  $region19: #{lstm_model_forward.1} parent=0 // pred_check_branch
    %23 = sbr.rel (0) target = $region21
  $region20: #{lstm_model_forward.1} parent=0 // pred_region
    _
  $region21: #{lstm_model_forward.1} parent=0 // pred_fallthru
    _
  // Predicated region
  $region22: #{lstm_model_forward.1} parent=0 // pred_check
    _
  $region23: #{lstm_model_forward.1} parent=0 // pred_check_branch
    %25 = sbr.rel (0) target = $region25
  $region24: #{lstm_model_forward.1} parent=0 // pred_region
    _
  $region25: #{lstm_model_forward.1} parent=0 // pred_fallthru
    _
  // Predicated region
  $region26: #{lstm_model_forward.1} parent=0 // pred_check
    _
  $region27: #{lstm_model_forward.1} parent=0 // pred_check_branch
    %27 = sbr.rel (0) target = $region29
  $region28: #{lstm_model_forward.1} parent=0 // pred_region
    _
  $region29: #{lstm_model_forward.1} parent=0 // pred_fallthru
    _
  // Predicated region
  $region30: #{lstm_model_forward.1} parent=0 // pred_check
    _
  $region31: #{lstm_model_forward.1} parent=0 // pred_check_branch
    %29 = sbr.rel (0) target = $region33
  $region32: #{lstm_model_forward.1} parent=0 // pred_region
    _
  $region33: #{lstm_model_forward.1} parent=0 // pred_fallthru
    _
  // Predicated region
  $region34: #{lstm_model_forward.1} parent=0 // pred_check
    _
  $region35: #{lstm_model_forward.1} parent=0 // pred_check_branch
    %31 = sbr.rel (0) target = $region37
  $region36: #{lstm_model_forward.1} parent=0 // pred_region
    _
  $region37: #{lstm_model_forward.1} parent=0 // pred_fallthru
    _
  %v32 = vld [vmem:[%s0] sm:$0xff]
  %v33 = vld [vmem:[%s0 + $0x8] sm:$0xff]
  %v34 = vld [vmem:[%s1] sm:$0xff]
  %v35 = vld [vmem:[%s1 + $0x8] sm:$0xff]
  %v36 = vld [vmem:[%s3] sm:$0x1]
  %v38 = vlaneseq
  %v39 = vshrl.u32 %v38, 7
  %v40 = vsub.s32 0, %v39
  %v41 = vrot.slane %v36, %v40
  %vm43 = vcmask 130048
  %v45 = vsel %vm43, %v32, 0
  %v48 = vsel %vm43, %v33, 0
  %50 = vmatprep.subr.mxu0 0.0
  %51 = vmatpush1.msra.mxu0 0.0
  %52 = vmatprep.subr.mxu0 0.0
  %53 = vmatpush1.msra.mxu0 0.0
  %54 = vmatprep.subr.mxu0 0.0
  %55 = vmatpush1.msra.mxu0 0.0
  %56 = vmatprep.subr.mxu0 0.0
  %57 = vmatpush1.msra.mxu0 0.0
  %58 = vmatprep.subr.mxu0 0.0
  %59 = vmatpush1.msra.mxu0 0.0
  %60 = vmatprep.subr.mxu0 0.0
  %61 = vmatpush1.msra.mxu0 0.0
  %62 = vmatprep.subr.mxu0 0.0
  %63 = vmatpush1.msra.mxu0 0.0
  %64 = vmatprep.subr.mxu0 0.0
  %65 = vmatpush1.msra.mxu0 0.0
  %66 = vmatprep.subr.mxu0 0.0
  %67 = vmatpush1.msra.mxu0 0.0
  %68 = vmatprep.subr.mxu0 0.0
  %69 = vmatpush1.msra.mxu0 0.0
  %70 = vmatprep.subr.mxu0 0.0
  %71 = vmatpush1.msra.mxu0 0.0
  %72 = vmatprep.subr.mxu0 0.0
  %73 = vmatpush1.msra.mxu0 0.0
  %74 = vmatprep.subr.mxu0 0.0
  %75 = vmatpush1.msra.mxu0 0.0
  %76 = vmatprep.subr.mxu0 0.0
  %77 = vmatpush1.msra.mxu0 0.0
  %78 = vmatprep.subr.mxu0 0.0
  %79 = vmatpush1.msra.mxu0 %v35
  %80 = vmatprep.subr.mxu0 0.0
  %81 = vmatpush1.msra.mxu0 %v34
  %82 = vmatprep.subr.mxu0 0.0
  %83 = vmatpush2.msra.mxu0 0.0
  %84 = vmatprep.subr.mxu0 0.0
  %85 = vmatpush2.msra.mxu0 0.0
  %86 = vmatprep.subr.mxu0 0.0
  %87 = vmatpush2.msra.mxu0 0.0
  %88 = vmatprep.subr.mxu0 0.0
  %89 = vmatpush2.msra.mxu0 0.0
  %90 = vmatprep.subr.mxu0 0.0
  %91 = vmatpush2.msra.mxu0 0.0
  %92 = vmatprep.subr.mxu0 0.0
  %93 = vmatpush2.msra.mxu0 0.0
  %94 = vmatprep.subr.mxu0 0.0
  %95 = vmatpush2.msra.mxu0 0.0
  %96 = vmatprep.subr.mxu0 0.0
  %97 = vmatpush2.msra.mxu0 0.0
  %98 = vmatprep.subr.mxu0 0.0
  %99 = vmatpush2.msra.mxu0 0.0
  %100 = vmatprep.subr.mxu0 0.0
  %101 = vmatpush2.msra.mxu0 0.0
  %102 = vmatprep.subr.mxu0 0.0
  %103 = vmatpush2.msra.mxu0 0.0
  %104 = vmatprep.subr.mxu0 0.0
  %105 = vmatpush2.msra.mxu0 0.0
  %106 = vmatprep.subr.mxu0 0.0
  %107 = vmatpush2.msra.mxu0 0.0
  %108 = vmatprep.subr.mxu0 0.0
  %109 = vmatpush2.msra.mxu0 0.0
  %110 = vmatprep.subr.mxu0 0.0
  %111 = vmatpush2.msra.mxu0 0.0
  %112 = vmatprep.subr.mxu0 0.0
  %113 = vmatpush2.msra.mxu0 0.0
  %114 = vmatprep.mubr.f32.mxu0 0.0
  %115 = vmatmul.mubr.f32.gmra.mxu0 %v45
  %v116 = vpop.f32.mrf.mxu0
  %v117 = vadd.f32 %v41, %v116
  %v118 = vpop.f32.mrf.mxu0
  %119 = vmatprep.mubr.f32.mxu0 0.0
  %120 = vmatmul.mubr.f32.gmra.mxu0 %v48
  %v121 = vpop.f32.mrf.mxu0
  %v122 = vadd.f32 %v41, %v121
  %v123 = vpop.f32.mrf.mxu0
  %124 = vdwg.mxu0
  %125 = vst [vmem:[#allocation2] sm:$0xff] %v117
  %126 = vst [vmem:[#allocation2 + $0x8] sm:$0xff] %v122
  %v127 = vld [vmem:[%s2] sm:$0xff]
  %v128 = vld [vmem:[%s2 + $0x8] sm:$0xff]
  %v129 = vld [vmem:[%s2 + $0x10] sm:$0xff]
  %v130 = vld [vmem:[%s2 + $0x18] sm:$0xff]
  %v131 = vld [vmem:[#allocation2] sm:$0x3]
  %vm132 = vcmask 261120
  %v134 = vsel %vm132, 0.0, 0
  %136 = vmatprep.subr.mxu0 0.0
  %137 = vmatpush1.msra.mxu0 0.0
  %138 = vmatprep.subr.mxu0 0.0
  %139 = vmatpush1.msra.mxu0 0.0
  %140 = vmatprep.subr.mxu0 0.0
  %141 = vmatpush1.msra.mxu0 0.0
  %142 = vmatprep.subr.mxu0 0.0
  %143 = vmatpush1.msra.mxu0 0.0
  %144 = vmatprep.subr.mxu0 0.0
  %145 = vmatpush1.msra.mxu0 0.0
  %146 = vmatprep.subr.mxu0 0.0
  %147 = vmatpush1.msra.mxu0 0.0
  %148 = vmatprep.subr.mxu0 0.0
  %149 = vmatpush1.msra.mxu0 0.0
  %150 = vmatprep.subr.mxu0 0.0
  %151 = vmatpush1.msra.mxu0 0.0
  %152 = vmatprep.subr.mxu0 0.0
  %153 = vmatpush1.msra.mxu0 0.0
  %154 = vmatprep.subr.mxu0 0.0
  %155 = vmatpush1.msra.mxu0 0.0
  %156 = vmatprep.subr.mxu0 0.0
  %157 = vmatpush1.msra.mxu0 0.0
  %158 = vmatprep.subr.mxu0 0.0
  %159 = vmatpush1.msra.mxu0 0.0
  %160 = vmatprep.subr.mxu0 0.0
  %161 = vmatpush1.msra.mxu0 %v130
  %162 = vmatprep.subr.mxu0 0.0
  %163 = vmatpush1.msra.mxu0 %v129
  %164 = vmatprep.subr.mxu0 0.0
  %165 = vmatpush1.msra.mxu0 %v128
  %166 = vmatprep.subr.mxu0 0.0
  %167 = vmatpush1.msra.mxu0 %v127
  %168 = vmatprep.subr.mxu0 0.0
  %169 = vmatpush2.msra.mxu0 0.0
  %170 = vmatprep.subr.mxu0 0.0
  %171 = vmatpush2.msra.mxu0 0.0
  %172 = vmatprep.subr.mxu0 0.0
  %173 = vmatpush2.msra.mxu0 0.0
  %174 = vmatprep.subr.mxu0 0.0
  %175 = vmatpush2.msra.mxu0 0.0
  %176 = vmatprep.subr.mxu0 0.0
  %177 = vmatpush2.msra.mxu0 0.0
  %178 = vmatprep.subr.mxu0 0.0
  %179 = vmatpush2.msra.mxu0 0.0
  %180 = vmatprep.subr.mxu0 0.0
  %181 = vmatpush2.msra.mxu0 0.0
  %182 = vmatprep.subr.mxu0 0.0
  %183 = vmatpush2.msra.mxu0 0.0
  %184 = vmatprep.subr.mxu0 0.0
  %185 = vmatpush2.msra.mxu0 0.0
  %186 = vmatprep.subr.mxu0 0.0
  %187 = vmatpush2.msra.mxu0 0.0
  %188 = vmatprep.subr.mxu0 0.0
  %189 = vmatpush2.msra.mxu0 0.0
  %190 = vmatprep.subr.mxu0 0.0
  %191 = vmatpush2.msra.mxu0 0.0
  %192 = vmatprep.subr.mxu0 0.0
  %193 = vmatpush2.msra.mxu0 0.0
  %194 = vmatprep.subr.mxu0 0.0
  %195 = vmatpush2.msra.mxu0 0.0
  %196 = vmatprep.subr.mxu0 0.0
  %197 = vmatpush2.msra.mxu0 0.0
  %198 = vmatprep.subr.mxu0 0.0
  %199 = vmatpush2.msra.mxu0 0.0
  %200 = vmatprep.mubr.f32.mxu0 0.0
  %201 = vmatmul.mubr.f32.gmra.mxu0 %v134
  %v202 = vpop.f32.mrf.mxu0
  %v203 = vadd.f32 0.0, %v202
  %v204 = vpop.f32.mrf.mxu0
  %205 = vdwg.mxu0
  %v206 = vadd.f32 %v131, %v203
  %v207 = vxor.u32 %v206, 2147483648
  %v208 = vmul.f32 %v207, 1.442695
  %v209 = vpow.pop %v208
  %v210 = vadd.f32 %v209, 1.0
  %v211 = vrcp.pop %v210
  %v212 = vmul.f32 1.0, %v211
  %v213 = vtanh.pop %v206
  %v214 = vmul.f32 %v212, 0.0
  %216 = vrot.lane.b32.xlu0 %v213, 64
  %v217 = vpop.permute.xlu0 %216
  %v219 = vmul.f32 %v212, %v217
  %221 = vrot.lane.b32.xlu0 %v219, 32
  %v222 = vpop.permute.xlu0 %221
  %v224 = vadd.f32 %v214, %v222
  %v225 = vtanh.pop %v224
  %227 = vrot.lane.b32.xlu0 %v225, 64
  %v228 = vpop.permute.xlu0 %227
  %v230 = vmul.f32 %v212, %v228
  %232 = vrot.lane.b32.xlu0 %v230, 32
  %v233 = vpop.permute.xlu0 %232
  %vm235 = vcmask 254976
  %236 = vst.msk [vmem:[#allocation3] sm:$0x3] %vm235, %v233
  %v237 = vld [vmem:[#allocation2 + $0x2] sm:$0x3]
  %v238 = vsel %vm132, %v233, 0
  %240 = vmatprep.subr.mxu0 0.0
  %241 = vmatpush1.msra.mxu0 0.0
  %242 = vmatprep.subr.mxu0 0.0
  %243 = vmatpush1.msra.mxu0 0.0
  %244 = vmatprep.subr.mxu0 0.0
  %245 = vmatpush1.msra.mxu0 0.0
  %246 = vmatprep.subr.mxu0 0.0
  %247 = vmatpush1.msra.mxu0 0.0
  %248 = vmatprep.subr.mxu0 0.0
  %249 = vmatpush1.msra.mxu0 0.0
  %250 = vmatprep.subr.mxu0 0.0
  %251 = vmatpush1.msra.mxu0 0.0
  %252 = vmatprep.subr.mxu0 0.0
  %253 = vmatpush1.msra.mxu0 0.0
  %254 = vmatprep.subr.mxu0 0.0
  %255 = vmatpush1.msra.mxu0 0.0
  %256 = vmatprep.subr.mxu0 0.0
  %257 = vmatpush1.msra.mxu0 0.0
  %258 = vmatprep.subr.mxu0 0.0
  %259 = vmatpush1.msra.mxu0 0.0
  %260 = vmatprep.subr.mxu0 0.0
  %261 = vmatpush1.msra.mxu0 0.0
  %262 = vmatprep.subr.mxu0 0.0
  %263 = vmatpush1.msra.mxu0 0.0
  %264 = vmatprep.subr.mxu0 0.0
  %265 = vmatpush1.msra.mxu0 %v130
  %266 = vmatprep.subr.mxu0 0.0
  %267 = vmatpush1.msra.mxu0 %v129
  %268 = vmatprep.subr.mxu0 0.0
  %269 = vmatpush1.msra.mxu0 %v128
  %270 = vmatprep.subr.mxu0 0.0
  %271 = vmatpush1.msra.mxu0 %v127
  %272 = vmatprep.subr.mxu0 0.0
  %273 = vmatpush2.msra.mxu0 0.0
  %274 = vmatprep.subr.mxu0 0.0
  %275 = vmatpush2.msra.mxu0 0.0
  %276 = vmatprep.subr.mxu0 0.0
  %277 = vmatpush2.msra.mxu0 0.0
  %278 = vmatprep.subr.mxu0 0.0
  %279 = vmatpush2.msra.mxu0 0.0
  %280 = vmatprep.subr.mxu0 0.0
  %281 = vmatpush2.msra.mxu0 0.0
  %282 = vmatprep.subr.mxu0 0.0
  %283 = vmatpush2.msra.mxu0 0.0
  %284 = vmatprep.subr.mxu0 0.0
  %285 = vmatpush2.msra.mxu0 0.0
  %286 = vmatprep.subr.mxu0 0.0
  %287 = vmatpush2.msra.mxu0 0.0
  %288 = vmatprep.subr.mxu0 0.0
  %289 = vmatpush2.msra.mxu0 0.0
  %290 = vmatprep.subr.mxu0 0.0
  %291 = vmatpush2.msra.mxu0 0.0
  %292 = vmatprep.subr.mxu0 0.0
  %293 = vmatpush2.msra.mxu0 0.0
  %294 = vmatprep.subr.mxu0 0.0
  %295 = vmatpush2.msra.mxu0 0.0
  %296 = vmatprep.subr.mxu0 0.0
  %297 = vmatpush2.msra.mxu0 0.0
  %298 = vmatprep.subr.mxu0 0.0
  %299 = vmatpush2.msra.mxu0 0.0
  %300 = vmatprep.subr.mxu0 0.0
  %301 = vmatpush2.msra.mxu0 0.0
  %302 = vmatprep.subr.mxu0 0.0
  %303 = vmatpush2.msra.mxu0 0.0
  %304 = vmatprep.mubr.f32.mxu0 0.0
  %305 = vmatmul.mubr.f32.gmra.mxu0 %v238
  %v306 = vpop.f32.mrf.mxu0
  %v307 = vadd.f32 0.0, %v306
  %v308 = vpop.f32.mrf.mxu0
  %309 = vdwg.mxu0
  %v310 = vadd.f32 %v237, %v307
  %v311 = vxor.u32 %v310, 2147483648
  %v312 = vmul.f32 %v311, 1.442695
  %v313 = vpow.pop %v312
  %v314 = vadd.f32 %v313, 1.0
  %v315 = vrcp.pop %v314
  %v316 = vmul.f32 1.0, %v315
  %v317 = vtanh.pop %v310
  %v318 = vmul.f32 %v316, %v224
  %320 = vrot.lane.b32.xlu0 %v317, 64
  %v321 = vpop.permute.xlu0 %320
  %v323 = vmul.f32 %v316, %v321
  %325 = vrot.lane.b32.xlu0 %v323, 32
  %v326 = vpop.permute.xlu0 %325
  %v328 = vadd.f32 %v318, %v326
  %v329 = vtanh.pop %v328
  %331 = vrot.lane.b32.xlu0 %v329, 64
  %v332 = vpop.permute.xlu0 %331
  %v334 = vmul.f32 %v316, %v332
  %336 = vrot.lane.b32.xlu0 %v334, 32
  %v337 = vpop.permute.xlu0 %336
  %339 = vst.msk [vmem:[#allocation3 + $0x2] sm:$0x3] %vm235, %v337
  %v340 = vld [vmem:[#allocation2 + $0x4] sm:$0x3]
  %v341 = vsel %vm132, %v337, 0
  %343 = vmatprep.subr.mxu0 0.0
  %344 = vmatpush1.msra.mxu0 0.0
  %345 = vmatprep.subr.mxu0 0.0
  %346 = vmatpush1.msra.mxu0 0.0
  %347 = vmatprep.subr.mxu0 0.0
  %348 = vmatpush1.msra.mxu0 0.0
  %349 = vmatprep.subr.mxu0 0.0
  %350 = vmatpush1.msra.mxu0 0.0
  %351 = vmatprep.subr.mxu0 0.0
  %352 = vmatpush1.msra.mxu0 0.0
  %353 = vmatprep.subr.mxu0 0.0
  %354 = vmatpush1.msra.mxu0 0.0
  %355 = vmatprep.subr.mxu0 0.0
  %356 = vmatpush1.msra.mxu0 0.0
  %357 = vmatprep.subr.mxu0 0.0
  %358 = vmatpush1.msra.mxu0 0.0
  %359 = vmatprep.subr.mxu0 0.0
  %360 = vmatpush1.msra.mxu0 0.0
  %361 = vmatprep.subr.mxu0 0.0
  %362 = vmatpush1.msra.mxu0 0.0
  %363 = vmatprep.subr.mxu0 0.0
  %364 = vmatpush1.msra.mxu0 0.0
  %365 = vmatprep.subr.mxu0 0.0
  %366 = vmatpush1.msra.mxu0 0.0
  %367 = vmatprep.subr.mxu0 0.0
  %368 = vmatpush1.msra.mxu0 %v130
  %369 = vmatprep.subr.mxu0 0.0
  %370 = vmatpush1.msra.mxu0 %v129
  %371 = vmatprep.subr.mxu0 0.0
  %372 = vmatpush1.msra.mxu0 %v128
  %373 = vmatprep.subr.mxu0 0.0
  %374 = vmatpush1.msra.mxu0 %v127
  %375 = vmatprep.subr.mxu0 0.0
  %376 = vmatpush2.msra.mxu0 0.0
  %377 = vmatprep.subr.mxu0 0.0
  %378 = vmatpush2.msra.mxu0 0.0
  %379 = vmatprep.subr.mxu0 0.0
  %380 = vmatpush2.msra.mxu0 0.0
  %381 = vmatprep.subr.mxu0 0.0
  %382 = vmatpush2.msra.mxu0 0.0
  %383 = vmatprep.subr.mxu0 0.0
  %384 = vmatpush2.msra.mxu0 0.0
  %385 = vmatprep.subr.mxu0 0.0
  %386 = vmatpush2.msra.mxu0 0.0
  %387 = vmatprep.subr.mxu0 0.0
  %388 = vmatpush2.msra.mxu0 0.0
  %389 = vmatprep.subr.mxu0 0.0
  %390 = vmatpush2.msra.mxu0 0.0
  %391 = vmatprep.subr.mxu0 0.0
  %392 = vmatpush2.msra.mxu0 0.0
  %393 = vmatprep.subr.mxu0 0.0
  %394 = vmatpush2.msra.mxu0 0.0
  %395 = vmatprep.subr.mxu0 0.0
  %396 = vmatpush2.msra.mxu0 0.0
  %397 = vmatprep.subr.mxu0 0.0
  %398 = vmatpush2.msra.mxu0 0.0
  %399 = vmatprep.subr.mxu0 0.0
  %400 = vmatpush2.msra.mxu0 0.0
  %401 = vmatprep.subr.mxu0 0.0
  %402 = vmatpush2.msra.mxu0 0.0
  %403 = vmatprep.subr.mxu0 0.0
  %404 = vmatpush2.msra.mxu0 0.0
  %405 = vmatprep.subr.mxu0 0.0
  %406 = vmatpush2.msra.mxu0 0.0
  %407 = vmatprep.mubr.f32.mxu0 0.0
  %408 = vmatmul.mubr.f32.gmra.mxu0 %v341
  %v409 = vpop.f32.mrf.mxu0
  %v410 = vadd.f32 0.0, %v409
  %v411 = vpop.f32.mrf.mxu0
  %412 = vdwg.mxu0
  %v413 = vadd.f32 %v340, %v410
  %v414 = vxor.u32 %v413, 2147483648
  %v415 = vmul.f32 %v414, 1.442695
  %v416 = vpow.pop %v415
  %v417 = vadd.f32 %v416, 1.0
  %v418 = vrcp.pop %v417
  %v419 = vmul.f32 1.0, %v418
  %v420 = vtanh.pop %v413
  %v421 = vmul.f32 %v419, %v328
  %423 = vrot.lane.b32.xlu0 %v420, 64
  %v424 = vpop.permute.xlu0 %423
  %v426 = vmul.f32 %v419, %v424
  %428 = vrot.lane.b32.xlu0 %v426, 32
  %v429 = vpop.permute.xlu0 %428
  %v431 = vadd.f32 %v421, %v429
  %v432 = vtanh.pop %v431
  %434 = vrot.lane.b32.xlu0 %v432, 64
  %v435 = vpop.permute.xlu0 %434
  %v437 = vmul.f32 %v419, %v435
  %439 = vrot.lane.b32.xlu0 %v437, 32
  %v440 = vpop.permute.xlu0 %439
  %442 = vst.msk [vmem:[#allocation3 + $0x4] sm:$0x3] %vm235, %v440
  %v443 = vld [vmem:[#allocation2 + $0x6] sm:$0x3]
  %v444 = vsel %vm132, %v440, 0
  %446 = vmatprep.subr.mxu0 0.0
  %447 = vmatpush1.msra.mxu0 0.0
  %448 = vmatprep.subr.mxu0 0.0
  %449 = vmatpush1.msra.mxu0 0.0
  %450 = vmatprep.subr.mxu0 0.0
  %451 = vmatpush1.msra.mxu0 0.0
  %452 = vmatprep.subr.mxu0 0.0
  %453 = vmatpush1.msra.mxu0 0.0
  %454 = vmatprep.subr.mxu0 0.0
  %455 = vmatpush1.msra.mxu0 0.0
  %456 = vmatprep.subr.mxu0 0.0
  %457 = vmatpush1.msra.mxu0 0.0
  %458 = vmatprep.subr.mxu0 0.0
  %459 = vmatpush1.msra.mxu0 0.0
  %460 = vmatprep.subr.mxu0 0.0
  %461 = vmatpush1.msra.mxu0 0.0
  %462 = vmatprep.subr.mxu0 0.0
  %463 = vmatpush1.msra.mxu0 0.0
  %464 = vmatprep.subr.mxu0 0.0
  %465 = vmatpush1.msra.mxu0 0.0
  %466 = vmatprep.subr.mxu0 0.0
  %467 = vmatpush1.msra.mxu0 0.0
  %468 = vmatprep.subr.mxu0 0.0
  %469 = vmatpush1.msra.mxu0 0.0
  %470 = vmatprep.subr.mxu0 0.0
  %471 = vmatpush1.msra.mxu0 %v130
  %472 = vmatprep.subr.mxu0 0.0
  %473 = vmatpush1.msra.mxu0 %v129
  %474 = vmatprep.subr.mxu0 0.0
  %475 = vmatpush1.msra.mxu0 %v128
  %476 = vmatprep.subr.mxu0 0.0
  %477 = vmatpush1.msra.mxu0 %v127
  %478 = vmatprep.subr.mxu0 0.0
  %479 = vmatpush2.msra.mxu0 0.0
  %480 = vmatprep.subr.mxu0 0.0
  %481 = vmatpush2.msra.mxu0 0.0
  %482 = vmatprep.subr.mxu0 0.0
  %483 = vmatpush2.msra.mxu0 0.0
  %484 = vmatprep.subr.mxu0 0.0
  %485 = vmatpush2.msra.mxu0 0.0
  %486 = vmatprep.subr.mxu0 0.0
  %487 = vmatpush2.msra.mxu0 0.0
  %488 = vmatprep.subr.mxu0 0.0
  %489 = vmatpush2.msra.mxu0 0.0
  %490 = vmatprep.subr.mxu0 0.0
  %491 = vmatpush2.msra.mxu0 0.0
  %492 = vmatprep.subr.mxu0 0.0
  %493 = vmatpush2.msra.mxu0 0.0
  %494 = vmatprep.subr.mxu0 0.0
  %495 = vmatpush2.msra.mxu0 0.0
  %496 = vmatprep.subr.mxu0 0.0
  %497 = vmatpush2.msra.mxu0 0.0
  %498 = vmatprep.subr.mxu0 0.0
  %499 = vmatpush2.msra.mxu0 0.0
  %500 = vmatprep.subr.mxu0 0.0
  %501 = vmatpush2.msra.mxu0 0.0
  %502 = vmatprep.subr.mxu0 0.0
  %503 = vmatpush2.msra.mxu0 0.0
  %504 = vmatprep.subr.mxu0 0.0
  %505 = vmatpush2.msra.mxu0 0.0
  %506 = vmatprep.subr.mxu0 0.0
  %507 = vmatpush2.msra.mxu0 0.0
  %508 = vmatprep.subr.mxu0 0.0
  %509 = vmatpush2.msra.mxu0 0.0
  %510 = vmatprep.mubr.f32.mxu0 0.0
  %511 = vmatmul.mubr.f32.gmra.mxu0 %v444
  %v512 = vpop.f32.mrf.mxu0
  %v513 = vadd.f32 0.0, %v512
  %v514 = vpop.f32.mrf.mxu0
  %515 = vdwg.mxu0
  %v516 = vadd.f32 %v443, %v513
  %v517 = vxor.u32 %v516, 2147483648
  %v518 = vmul.f32 %v517, 1.442695
  %v519 = vpow.pop %v518
  %v520 = vadd.f32 %v519, 1.0
  %v521 = vrcp.pop %v520
  %v522 = vmul.f32 1.0, %v521
  %v523 = vtanh.pop %v516
  %v524 = vmul.f32 %v522, %v431
  %526 = vrot.lane.b32.xlu0 %v523, 64
  %v527 = vpop.permute.xlu0 %526
  %v529 = vmul.f32 %v522, %v527
  %531 = vrot.lane.b32.xlu0 %v529, 32
  %v532 = vpop.permute.xlu0 %531
  %v534 = vadd.f32 %v524, %v532
  %v535 = vtanh.pop %v534
  %537 = vrot.lane.b32.xlu0 %v535, 64
  %v538 = vpop.permute.xlu0 %537
  %v540 = vmul.f32 %v522, %v538
  %542 = vrot.lane.b32.xlu0 %v540, 32
  %v543 = vpop.permute.xlu0 %542
  %545 = vst.msk [vmem:[#allocation3 + $0x6] sm:$0x3] %vm235, %v543
  %v546 = vld [vmem:[#allocation2 + $0x8] sm:$0x3]
  %v547 = vsel %vm132, %v543, 0
  %549 = vmatprep.subr.mxu0 0.0
  %550 = vmatpush1.msra.mxu0 0.0
  %551 = vmatprep.subr.mxu0 0.0
  %552 = vmatpush1.msra.mxu0 0.0
  %553 = vmatprep.subr.mxu0 0.0
  %554 = vmatpush1.msra.mxu0 0.0
  %555 = vmatprep.subr.mxu0 0.0
  %556 = vmatpush1.msra.mxu0 0.0
  %557 = vmatprep.subr.mxu0 0.0
  %558 = vmatpush1.msra.mxu0 0.0
  %559 = vmatprep.subr.mxu0 0.0
  %560 = vmatpush1.msra.mxu0 0.0
  %561 = vmatprep.subr.mxu0 0.0
  %562 = vmatpush1.msra.mxu0 0.0
  %563 = vmatprep.subr.mxu0 0.0
  %564 = vmatpush1.msra.mxu0 0.0
  %565 = vmatprep.subr.mxu0 0.0
  %566 = vmatpush1.msra.mxu0 0.0
  %567 = vmatprep.subr.mxu0 0.0
  %568 = vmatpush1.msra.mxu0 0.0
  %569 = vmatprep.subr.mxu0 0.0
  %570 = vmatpush1.msra.mxu0 0.0
  %571 = vmatprep.subr.mxu0 0.0
  %572 = vmatpush1.msra.mxu0 0.0
  %573 = vmatprep.subr.mxu0 0.0
  %574 = vmatpush1.msra.mxu0 %v130
  %575 = vmatprep.subr.mxu0 0.0
  %576 = vmatpush1.msra.mxu0 %v129
  %577 = vmatprep.subr.mxu0 0.0
  %578 = vmatpush1.msra.mxu0 %v128
  %579 = vmatprep.subr.mxu0 0.0
  %580 = vmatpush1.msra.mxu0 %v127
  %581 = vmatprep.subr.mxu0 0.0
  %582 = vmatpush2.msra.mxu0 0.0
  %583 = vmatprep.subr.mxu0 0.0
  %584 = vmatpush2.msra.mxu0 0.0
  %585 = vmatprep.subr.mxu0 0.0
  %586 = vmatpush2.msra.mxu0 0.0
  %587 = vmatprep.subr.mxu0 0.0
  %588 = vmatpush2.msra.mxu0 0.0
  %589 = vmatprep.subr.mxu0 0.0
  %590 = vmatpush2.msra.mxu0 0.0
  %591 = vmatprep.subr.mxu0 0.0
  %592 = vmatpush2.msra.mxu0 0.0
  %593 = vmatprep.subr.mxu0 0.0
  %594 = vmatpush2.msra.mxu0 0.0
  %595 = vmatprep.subr.mxu0 0.0
  %596 = vmatpush2.msra.mxu0 0.0
  %597 = vmatprep.subr.mxu0 0.0
  %598 = vmatpush2.msra.mxu0 0.0
  %599 = vmatprep.subr.mxu0 0.0
  %600 = vmatpush2.msra.mxu0 0.0
  %601 = vmatprep.subr.mxu0 0.0
  %602 = vmatpush2.msra.mxu0 0.0
  %603 = vmatprep.subr.mxu0 0.0
  %604 = vmatpush2.msra.mxu0 0.0
  %605 = vmatprep.subr.mxu0 0.0
  %606 = vmatpush2.msra.mxu0 0.0
  %607 = vmatprep.subr.mxu0 0.0
  %608 = vmatpush2.msra.mxu0 0.0
  %609 = vmatprep.subr.mxu0 0.0
  %610 = vmatpush2.msra.mxu0 0.0
  %611 = vmatprep.subr.mxu0 0.0
  %612 = vmatpush2.msra.mxu0 0.0
  %613 = vmatprep.mubr.f32.mxu0 0.0
  %614 = vmatmul.mubr.f32.gmra.mxu0 %v547
  %v615 = vpop.f32.mrf.mxu0
  %v616 = vadd.f32 0.0, %v615
  %v617 = vpop.f32.mrf.mxu0
  %618 = vdwg.mxu0
  %v619 = vadd.f32 %v546, %v616
  %v620 = vxor.u32 %v619, 2147483648
  %v621 = vmul.f32 %v620, 1.442695
  %v622 = vpow.pop %v621
  %v623 = vadd.f32 %v622, 1.0
  %v624 = vrcp.pop %v623
  %v625 = vmul.f32 1.0, %v624
  %v626 = vtanh.pop %v619
  %v627 = vmul.f32 %v625, %v534
  %629 = vrot.lane.b32.xlu0 %v626, 64
  %v630 = vpop.permute.xlu0 %629
  %v632 = vmul.f32 %v625, %v630
  %634 = vrot.lane.b32.xlu0 %v632, 32
  %v635 = vpop.permute.xlu0 %634
  %v637 = vadd.f32 %v627, %v635
  %v638 = vtanh.pop %v637
  %640 = vrot.lane.b32.xlu0 %v638, 64
  %v641 = vpop.permute.xlu0 %640
  %v643 = vmul.f32 %v625, %v641
  %645 = vrot.lane.b32.xlu0 %v643, 32
  %v646 = vpop.permute.xlu0 %645
  %648 = vst.msk [vmem:[#allocation3 + $0x8] sm:$0x3] %vm235, %v646
  %v649 = vld [vmem:[#allocation2 + $0xa] sm:$0x3]
  %v650 = vsel %vm132, %v646, 0
  %652 = vmatprep.subr.mxu0 0.0
  %653 = vmatpush1.msra.mxu0 0.0
  %654 = vmatprep.subr.mxu0 0.0
  %655 = vmatpush1.msra.mxu0 0.0
  %656 = vmatprep.subr.mxu0 0.0
  %657 = vmatpush1.msra.mxu0 0.0
  %658 = vmatprep.subr.mxu0 0.0
  %659 = vmatpush1.msra.mxu0 0.0
  %660 = vmatprep.subr.mxu0 0.0
  %661 = vmatpush1.msra.mxu0 0.0
  %662 = vmatprep.subr.mxu0 0.0
  %663 = vmatpush1.msra.mxu0 0.0
  %664 = vmatprep.subr.mxu0 0.0
  %665 = vmatpush1.msra.mxu0 0.0
  %666 = vmatprep.subr.mxu0 0.0
  %667 = vmatpush1.msra.mxu0 0.0
  %668 = vmatprep.subr.mxu0 0.0
  %669 = vmatpush1.msra.mxu0 0.0
  %670 = vmatprep.subr.mxu0 0.0
  %671 = vmatpush1.msra.mxu0 0.0
  %672 = vmatprep.subr.mxu0 0.0
  %673 = vmatpush1.msra.mxu0 0.0
  %674 = vmatprep.subr.mxu0 0.0
  %675 = vmatpush1.msra.mxu0 0.0
  %676 = vmatprep.subr.mxu0 0.0
  %677 = vmatpush1.msra.mxu0 %v130
  %678 = vmatprep.subr.mxu0 0.0
  %679 = vmatpush1.msra.mxu0 %v129
  %680 = vmatprep.subr.mxu0 0.0
  %681 = vmatpush1.msra.mxu0 %v128
  %682 = vmatprep.subr.mxu0 0.0
  %683 = vmatpush1.msra.mxu0 %v127
  %684 = vmatprep.subr.mxu0 0.0
  %685 = vmatpush2.msra.mxu0 0.0
  %686 = vmatprep.subr.mxu0 0.0
  %687 = vmatpush2.msra.mxu0 0.0
  %688 = vmatprep.subr.mxu0 0.0
  %689 = vmatpush2.msra.mxu0 0.0
  %690 = vmatprep.subr.mxu0 0.0
  %691 = vmatpush2.msra.mxu0 0.0
  %692 = vmatprep.subr.mxu0 0.0
  %693 = vmatpush2.msra.mxu0 0.0
  %694 = vmatprep.subr.mxu0 0.0
  %695 = vmatpush2.msra.mxu0 0.0
  %696 = vmatprep.subr.mxu0 0.0
  %697 = vmatpush2.msra.mxu0 0.0
  %698 = vmatprep.subr.mxu0 0.0
  %699 = vmatpush2.msra.mxu0 0.0
  %700 = vmatprep.subr.mxu0 0.0
  %701 = vmatpush2.msra.mxu0 0.0
  %702 = vmatprep.subr.mxu0 0.0
  %703 = vmatpush2.msra.mxu0 0.0
  %704 = vmatprep.subr.mxu0 0.0
  %705 = vmatpush2.msra.mxu0 0.0
  %706 = vmatprep.subr.mxu0 0.0
  %707 = vmatpush2.msra.mxu0 0.0
  %708 = vmatprep.subr.mxu0 0.0
  %709 = vmatpush2.msra.mxu0 0.0
  %710 = vmatprep.subr.mxu0 0.0
  %711 = vmatpush2.msra.mxu0 0.0
  %712 = vmatprep.subr.mxu0 0.0
  %713 = vmatpush2.msra.mxu0 0.0
  %714 = vmatprep.subr.mxu0 0.0
  %715 = vmatpush2.msra.mxu0 0.0
  %716 = vmatprep.mubr.f32.mxu0 0.0
  %717 = vmatmul.mubr.f32.gmra.mxu0 %v650
  %v718 = vpop.f32.mrf.mxu0
  %v719 = vadd.f32 0.0, %v718
  %v720 = vpop.f32.mrf.mxu0
  %721 = vdwg.mxu0
  %v722 = vadd.f32 %v649, %v719
  %v723 = vxor.u32 %v722, 2147483648
  %v724 = vmul.f32 %v723, 1.442695
  %v725 = vpow.pop %v724
  %v726 = vadd.f32 %v725, 1.0
  %v727 = vrcp.pop %v726
  %v728 = vmul.f32 1.0, %v727
  %v729 = vtanh.pop %v722
  %v730 = vmul.f32 %v728, %v637
  %732 = vrot.lane.b32.xlu0 %v729, 64
  %v733 = vpop.permute.xlu0 %732
  %v735 = vmul.f32 %v728, %v733
  %737 = vrot.lane.b32.xlu0 %v735, 32
  %v738 = vpop.permute.xlu0 %737
  %v740 = vadd.f32 %v730, %v738
  %v741 = vtanh.pop %v740
  %743 = vrot.lane.b32.xlu0 %v741, 64
  %v744 = vpop.permute.xlu0 %743
  %v746 = vmul.f32 %v728, %v744
  %748 = vrot.lane.b32.xlu0 %v746, 32
  %v749 = vpop.permute.xlu0 %748
  %751 = vst.msk [vmem:[#allocation3 + $0xa] sm:$0x3] %vm235, %v749
  %v752 = vld [vmem:[#allocation2 + $0xc] sm:$0x3]
  %v753 = vsel %vm132, %v749, 0
  %755 = vmatprep.subr.mxu0 0.0
  %756 = vmatpush1.msra.mxu0 0.0
  %757 = vmatprep.subr.mxu0 0.0
  %758 = vmatpush1.msra.mxu0 0.0
  %759 = vmatprep.subr.mxu0 0.0
  %760 = vmatpush1.msra.mxu0 0.0
  %761 = vmatprep.subr.mxu0 0.0
  %762 = vmatpush1.msra.mxu0 0.0
  %763 = vmatprep.subr.mxu0 0.0
  %764 = vmatpush1.msra.mxu0 0.0
  %765 = vmatprep.subr.mxu0 0.0
  %766 = vmatpush1.msra.mxu0 0.0
  %767 = vmatprep.subr.mxu0 0.0
  %768 = vmatpush1.msra.mxu0 0.0
  %769 = vmatprep.subr.mxu0 0.0
  %770 = vmatpush1.msra.mxu0 0.0
  %771 = vmatprep.subr.mxu0 0.0
  %772 = vmatpush1.msra.mxu0 0.0
  %773 = vmatprep.subr.mxu0 0.0
  %774 = vmatpush1.msra.mxu0 0.0
  %775 = vmatprep.subr.mxu0 0.0
  %776 = vmatpush1.msra.mxu0 0.0
  %777 = vmatprep.subr.mxu0 0.0
  %778 = vmatpush1.msra.mxu0 0.0
  %779 = vmatprep.subr.mxu0 0.0
  %780 = vmatpush1.msra.mxu0 %v130
  %781 = vmatprep.subr.mxu0 0.0
  %782 = vmatpush1.msra.mxu0 %v129
  %783 = vmatprep.subr.mxu0 0.0
  %784 = vmatpush1.msra.mxu0 %v128
  %785 = vmatprep.subr.mxu0 0.0
  %786 = vmatpush1.msra.mxu0 %v127
  %787 = vmatprep.subr.mxu0 0.0
  %788 = vmatpush2.msra.mxu0 0.0
  %789 = vmatprep.subr.mxu0 0.0
  %790 = vmatpush2.msra.mxu0 0.0
  %791 = vmatprep.subr.mxu0 0.0
  %792 = vmatpush2.msra.mxu0 0.0
  %793 = vmatprep.subr.mxu0 0.0
  %794 = vmatpush2.msra.mxu0 0.0
  %795 = vmatprep.subr.mxu0 0.0
  %796 = vmatpush2.msra.mxu0 0.0
  %797 = vmatprep.subr.mxu0 0.0
  %798 = vmatpush2.msra.mxu0 0.0
  %799 = vmatprep.subr.mxu0 0.0
  %800 = vmatpush2.msra.mxu0 0.0
  %801 = vmatprep.subr.mxu0 0.0
  %802 = vmatpush2.msra.mxu0 0.0
  %803 = vmatprep.subr.mxu0 0.0
  %804 = vmatpush2.msra.mxu0 0.0
  %805 = vmatprep.subr.mxu0 0.0
  %806 = vmatpush2.msra.mxu0 0.0
  %807 = vmatprep.subr.mxu0 0.0
  %808 = vmatpush2.msra.mxu0 0.0
  %809 = vmatprep.subr.mxu0 0.0
  %810 = vmatpush2.msra.mxu0 0.0
  %811 = vmatprep.subr.mxu0 0.0
  %812 = vmatpush2.msra.mxu0 0.0
  %813 = vmatprep.subr.mxu0 0.0
  %814 = vmatpush2.msra.mxu0 0.0
  %815 = vmatprep.subr.mxu0 0.0
  %816 = vmatpush2.msra.mxu0 0.0
  %817 = vmatprep.subr.mxu0 0.0
  %818 = vmatpush2.msra.mxu0 0.0
  %819 = vmatprep.mubr.f32.mxu0 0.0
  %820 = vmatmul.mubr.f32.gmra.mxu0 %v753
  %v821 = vpop.f32.mrf.mxu0
  %v822 = vadd.f32 0.0, %v821
  %v823 = vpop.f32.mrf.mxu0
  %824 = vdwg.mxu0
  %v825 = vadd.f32 %v752, %v822
  %v826 = vxor.u32 %v825, 2147483648
  %v827 = vmul.f32 %v826, 1.442695
  %v828 = vpow.pop %v827
  %v829 = vadd.f32 %v828, 1.0
  %v830 = vrcp.pop %v829
  %v831 = vmul.f32 1.0, %v830
  %v832 = vtanh.pop %v825
  %v833 = vmul.f32 %v831, %v740
  %835 = vrot.lane.b32.xlu0 %v832, 64
  %v836 = vpop.permute.xlu0 %835
  %v838 = vmul.f32 %v831, %v836
  %840 = vrot.lane.b32.xlu0 %v838, 32
  %v841 = vpop.permute.xlu0 %840
  %v843 = vadd.f32 %v833, %v841
  %v844 = vtanh.pop %v843
  %846 = vrot.lane.b32.xlu0 %v844, 64
  %v847 = vpop.permute.xlu0 %846
  %v849 = vmul.f32 %v831, %v847
  %851 = vrot.lane.b32.xlu0 %v849, 32
  %v852 = vpop.permute.xlu0 %851
  %854 = vst.msk [vmem:[#allocation3 + $0xc] sm:$0x3] %vm235, %v852
  %v855 = vld [vmem:[#allocation2 + $0xe] sm:$0x3]
  %v856 = vsel %vm132, %v852, 0
  %858 = vmatprep.subr.mxu0 0.0
  %859 = vmatpush1.msra.mxu0 0.0
  %860 = vmatprep.subr.mxu0 0.0
  %861 = vmatpush1.msra.mxu0 0.0
  %862 = vmatprep.subr.mxu0 0.0
  %863 = vmatpush1.msra.mxu0 0.0
  %864 = vmatprep.subr.mxu0 0.0
  %865 = vmatpush1.msra.mxu0 0.0
  %866 = vmatprep.subr.mxu0 0.0
  %867 = vmatpush1.msra.mxu0 0.0
  %868 = vmatprep.subr.mxu0 0.0
  %869 = vmatpush1.msra.mxu0 0.0
  %870 = vmatprep.subr.mxu0 0.0
  %871 = vmatpush1.msra.mxu0 0.0
  %872 = vmatprep.subr.mxu0 0.0
  %873 = vmatpush1.msra.mxu0 0.0
  %874 = vmatprep.subr.mxu0 0.0
  %875 = vmatpush1.msra.mxu0 0.0
  %876 = vmatprep.subr.mxu0 0.0
  %877 = vmatpush1.msra.mxu0 0.0
  %878 = vmatprep.subr.mxu0 0.0
  %879 = vmatpush1.msra.mxu0 0.0
  %880 = vmatprep.subr.mxu0 0.0
  %881 = vmatpush1.msra.mxu0 0.0
  %882 = vmatprep.subr.mxu0 0.0
  %883 = vmatpush1.msra.mxu0 %v130
  %884 = vmatprep.subr.mxu0 0.0
  %885 = vmatpush1.msra.mxu0 %v129
  %886 = vmatprep.subr.mxu0 0.0
  %887 = vmatpush1.msra.mxu0 %v128
  %888 = vmatprep.subr.mxu0 0.0
  %889 = vmatpush1.msra.mxu0 %v127
  %890 = vmatprep.subr.mxu0 0.0
  %891 = vmatpush2.msra.mxu0 0.0
  %892 = vmatprep.subr.mxu0 0.0
  %893 = vmatpush2.msra.mxu0 0.0
  %894 = vmatprep.subr.mxu0 0.0
  %895 = vmatpush2.msra.mxu0 0.0
  %896 = vmatprep.subr.mxu0 0.0
  %897 = vmatpush2.msra.mxu0 0.0
  %898 = vmatprep.subr.mxu0 0.0
  %899 = vmatpush2.msra.mxu0 0.0
  %900 = vmatprep.subr.mxu0 0.0
  %901 = vmatpush2.msra.mxu0 0.0
  %902 = vmatprep.subr.mxu0 0.0
  %903 = vmatpush2.msra.mxu0 0.0
  %904 = vmatprep.subr.mxu0 0.0
  %905 = vmatpush2.msra.mxu0 0.0
  %906 = vmatprep.subr.mxu0 0.0
  %907 = vmatpush2.msra.mxu0 0.0
  %908 = vmatprep.subr.mxu0 0.0
  %909 = vmatpush2.msra.mxu0 0.0
  %910 = vmatprep.subr.mxu0 0.0
  %911 = vmatpush2.msra.mxu0 0.0
  %912 = vmatprep.subr.mxu0 0.0
  %913 = vmatpush2.msra.mxu0 0.0
  %914 = vmatprep.subr.mxu0 0.0
  %915 = vmatpush2.msra.mxu0 0.0
  %916 = vmatprep.subr.mxu0 0.0
  %917 = vmatpush2.msra.mxu0 0.0
  %918 = vmatprep.subr.mxu0 0.0
  %919 = vmatpush2.msra.mxu0 0.0
  %920 = vmatprep.subr.mxu0 0.0
  %921 = vmatpush2.msra.mxu0 0.0
  %922 = vmatprep.mubr.f32.mxu0 0.0
  %923 = vmatmul.mubr.f32.gmra.mxu0 %v856
  %v924 = vpop.f32.mrf.mxu0
  %v925 = vadd.f32 0.0, %v924
  %v926 = vpop.f32.mrf.mxu0
  %927 = vdwg.mxu0
  %v928 = vadd.f32 %v855, %v925
  %v929 = vxor.u32 %v928, 2147483648
  %v930 = vmul.f32 %v929, 1.442695
  %v931 = vpow.pop %v930
  %v932 = vadd.f32 %v931, 1.0
  %v933 = vrcp.pop %v932
  %v934 = vmul.f32 1.0, %v933
  %v935 = vtanh.pop %v928
  %v936 = vmul.f32 %v934, %v843
  %938 = vrot.lane.b32.xlu0 %v935, 64
  %v939 = vpop.permute.xlu0 %938
  %v941 = vmul.f32 %v934, %v939
  %943 = vrot.lane.b32.xlu0 %v941, 32
  %v944 = vpop.permute.xlu0 %943
  %v946 = vadd.f32 %v936, %v944
  %v947 = vtanh.pop %v946
  %949 = vrot.lane.b32.xlu0 %v947, 64
  %v950 = vpop.permute.xlu0 %949
  %v952 = vmul.f32 %v934, %v950
  %954 = vrot.lane.b32.xlu0 %v952, 32
  %v955 = vpop.permute.xlu0 %954
  %957 = vst.msk [vmem:[#allocation3 + $0xe] sm:$0x3] %vm235, %v955
  %v958 = vld [vmem:[#allocation3] sm:$0xff]
  %v959 = vld [vmem:[#allocation3 + $0x8] sm:$0xff]
  %v960 = vld [vmem:[%s4] sm:$0xff]
  %v961 = vld [vmem:[%s4 + $0x8] sm:$0xff]
  %v962 = vld [vmem:[%s4 + $0x10] sm:$0xff]
  %v963 = vld [vmem:[%s4 + $0x18] sm:$0xff]
  %v964 = vld [vmem:[%s6] sm:$0x1]
  %v966 = vlaneseq
  %v967 = vshrl.u32 %v966, 7
  %v968 = vsub.s32 0, %v967
  %v969 = vrot.slane %v964, %v968
  %v972 = vsel %vm132, %v958, 0
  %v975 = vsel %vm132, %v959, 0
  %977 = vmatprep.subr.mxu0 0.0
  %978 = vmatpush1.msra.mxu0 0.0
  %979 = vmatprep.subr.mxu0 0.0
  %980 = vmatpush1.msra.mxu0 0.0
  %981 = vmatprep.subr.mxu0 0.0
  %982 = vmatpush1.msra.mxu0 0.0
  %983 = vmatprep.subr.mxu0 0.0
  %984 = vmatpush1.msra.mxu0 0.0
  %985 = vmatprep.subr.mxu0 0.0
  %986 = vmatpush1.msra.mxu0 0.0
  %987 = vmatprep.subr.mxu0 0.0
  %988 = vmatpush1.msra.mxu0 0.0
  %989 = vmatprep.subr.mxu0 0.0
  %990 = vmatpush1.msra.mxu0 0.0
  %991 = vmatprep.subr.mxu0 0.0
  %992 = vmatpush1.msra.mxu0 0.0
  %993 = vmatprep.subr.mxu0 0.0
  %994 = vmatpush1.msra.mxu0 0.0
  %995 = vmatprep.subr.mxu0 0.0
  %996 = vmatpush1.msra.mxu0 0.0
  %997 = vmatprep.subr.mxu0 0.0
  %998 = vmatpush1.msra.mxu0 0.0
  %999 = vmatprep.subr.mxu0 0.0
  %1000 = vmatpush1.msra.mxu0 0.0
  %1001 = vmatprep.subr.mxu0 0.0
  %1002 = vmatpush1.msra.mxu0 %v963
  %1003 = vmatprep.subr.mxu0 0.0
  %1004 = vmatpush1.msra.mxu0 %v962
  %1005 = vmatprep.subr.mxu0 0.0
  %1006 = vmatpush1.msra.mxu0 %v961
  %1007 = vmatprep.subr.mxu0 0.0
  %1008 = vmatpush1.msra.mxu0 %v960
  %1009 = vmatprep.subr.mxu0 0.0
  %1010 = vmatpush2.msra.mxu0 0.0
  %1011 = vmatprep.subr.mxu0 0.0
  %1012 = vmatpush2.msra.mxu0 0.0
  %1013 = vmatprep.subr.mxu0 0.0
  %1014 = vmatpush2.msra.mxu0 0.0
  %1015 = vmatprep.subr.mxu0 0.0
  %1016 = vmatpush2.msra.mxu0 0.0
  %1017 = vmatprep.subr.mxu0 0.0
  %1018 = vmatpush2.msra.mxu0 0.0
  %1019 = vmatprep.subr.mxu0 0.0
  %1020 = vmatpush2.msra.mxu0 0.0
  %1021 = vmatprep.subr.mxu0 0.0
  %1022 = vmatpush2.msra.mxu0 0.0
  %1023 = vmatprep.subr.mxu0 0.0
  %1024 = vmatpush2.msra.mxu0 0.0
  %1025 = vmatprep.subr.mxu0 0.0
  %1026 = vmatpush2.msra.mxu0 0.0
  %1027 = vmatprep.subr.mxu0 0.0
  %1028 = vmatpush2.msra.mxu0 0.0
  %1029 = vmatprep.subr.mxu0 0.0
  %1030 = vmatpush2.msra.mxu0 0.0
  %1031 = vmatprep.subr.mxu0 0.0
  %1032 = vmatpush2.msra.mxu0 0.0
  %1033 = vmatprep.subr.mxu0 0.0
  %1034 = vmatpush2.msra.mxu0 0.0
  %1035 = vmatprep.subr.mxu0 0.0
  %1036 = vmatpush2.msra.mxu0 0.0
  %1037 = vmatprep.subr.mxu0 0.0
  %1038 = vmatpush2.msra.mxu0 0.0
  %1039 = vmatprep.subr.mxu0 0.0
  %1040 = vmatpush2.msra.mxu0 0.0
  %1041 = vmatprep.mubr.f32.mxu0 0.0
  %1042 = vmatmul.mubr.f32.gmra.mxu0 %v972
  %v1043 = vpop.f32.mrf.mxu0
  %v1044 = vadd.f32 %v969, %v1043
  %v1045 = vpop.f32.mrf.mxu0
  %1046 = vmatprep.mubr.f32.mxu0 0.0
  %1047 = vmatmul.mubr.f32.gmra.mxu0 %v975
  %v1048 = vpop.f32.mrf.mxu0
  %v1049 = vadd.f32 %v969, %v1048
  %v1050 = vpop.f32.mrf.mxu0
  %1051 = vdwg.mxu0
  %1052 = vst [vmem:[#allocation2] sm:$0xff] %v1044
  %1053 = vst [vmem:[#allocation2 + $0x8] sm:$0xff] %v1049
  %v1054 = vld [vmem:[%s5] sm:$0xff]
  %v1055 = vld [vmem:[%s5 + $0x8] sm:$0xff]
  %v1056 = vld [vmem:[%s5 + $0x10] sm:$0xff]
  %v1057 = vld [vmem:[%s5 + $0x18] sm:$0xff]
  %v1058 = vld [vmem:[#allocation2] sm:$0x3]
  %1059 = vmatprep.subr.mxu0 0.0
  %1060 = vmatpush1.msra.mxu0 0.0
  %1061 = vmatprep.subr.mxu0 0.0
  %1062 = vmatpush1.msra.mxu0 0.0
  %1063 = vmatprep.subr.mxu0 0.0
  %1064 = vmatpush1.msra.mxu0 0.0
  %1065 = vmatprep.subr.mxu0 0.0
  %1066 = vmatpush1.msra.mxu0 0.0
  %1067 = vmatprep.subr.mxu0 0.0
  %1068 = vmatpush1.msra.mxu0 0.0
  %1069 = vmatprep.subr.mxu0 0.0
  %1070 = vmatpush1.msra.mxu0 0.0
  %1071 = vmatprep.subr.mxu0 0.0
  %1072 = vmatpush1.msra.mxu0 0.0
  %1073 = vmatprep.subr.mxu0 0.0
  %1074 = vmatpush1.msra.mxu0 0.0
  %1075 = vmatprep.subr.mxu0 0.0
  %1076 = vmatpush1.msra.mxu0 0.0
  %1077 = vmatprep.subr.mxu0 0.0
  %1078 = vmatpush1.msra.mxu0 0.0
  %1079 = vmatprep.subr.mxu0 0.0
  %1080 = vmatpush1.msra.mxu0 0.0
  %1081 = vmatprep.subr.mxu0 0.0
  %1082 = vmatpush1.msra.mxu0 0.0
  %1083 = vmatprep.subr.mxu0 0.0
  %1084 = vmatpush1.msra.mxu0 %v1057
  %1085 = vmatprep.subr.mxu0 0.0
  %1086 = vmatpush1.msra.mxu0 %v1056
  %1087 = vmatprep.subr.mxu0 0.0
  %1088 = vmatpush1.msra.mxu0 %v1055
  %1089 = vmatprep.subr.mxu0 0.0
  %1090 = vmatpush1.msra.mxu0 %v1054
  %1091 = vmatprep.subr.mxu0 0.0
  %1092 = vmatpush2.msra.mxu0 0.0
  %1093 = vmatprep.subr.mxu0 0.0
  %1094 = vmatpush2.msra.mxu0 0.0
  %1095 = vmatprep.subr.mxu0 0.0
  %1096 = vmatpush2.msra.mxu0 0.0
  %1097 = vmatprep.subr.mxu0 0.0
  %1098 = vmatpush2.msra.mxu0 0.0
  %1099 = vmatprep.subr.mxu0 0.0
  %1100 = vmatpush2.msra.mxu0 0.0
  %1101 = vmatprep.subr.mxu0 0.0
  %1102 = vmatpush2.msra.mxu0 0.0
  %1103 = vmatprep.subr.mxu0 0.0
  %1104 = vmatpush2.msra.mxu0 0.0
  %1105 = vmatprep.subr.mxu0 0.0
  %1106 = vmatpush2.msra.mxu0 0.0
  %1107 = vmatprep.subr.mxu0 0.0
  %1108 = vmatpush2.msra.mxu0 0.0
  %1109 = vmatprep.subr.mxu0 0.0
  %1110 = vmatpush2.msra.mxu0 0.0
  %1111 = vmatprep.subr.mxu0 0.0
  %1112 = vmatpush2.msra.mxu0 0.0
  %1113 = vmatprep.subr.mxu0 0.0
  %1114 = vmatpush2.msra.mxu0 0.0
  %1115 = vmatprep.subr.mxu0 0.0
  %1116 = vmatpush2.msra.mxu0 0.0
  %1117 = vmatprep.subr.mxu0 0.0
  %1118 = vmatpush2.msra.mxu0 0.0
  %1119 = vmatprep.subr.mxu0 0.0
  %1120 = vmatpush2.msra.mxu0 0.0
  %1121 = vmatprep.subr.mxu0 0.0
  %1122 = vmatpush2.msra.mxu0 0.0
  %1123 = vmatprep.mubr.f32.mxu0 0.0
  %1124 = vmatmul.mubr.f32.gmra.mxu0 %v134
  %v1125 = vpop.f32.mrf.mxu0
  %v1126 = vadd.f32 0.0, %v1125
  %v1127 = vpop.f32.mrf.mxu0
  %1128 = vdwg.mxu0
  %v1129 = vadd.f32 %v1058, %v1126
  %v1130 = vxor.u32 %v1129, 2147483648
  %v1131 = vmul.f32 %v1130, 1.442695
  %v1132 = vpow.pop %v1131
  %v1133 = vadd.f32 %v1132, 1.0
  %v1134 = vrcp.pop %v1133
  %v1135 = vmul.f32 1.0, %v1134
  %v1136 = vtanh.pop %v1129
  %v1137 = vmul.f32 %v1135, 0.0
  %1139 = vrot.lane.b32.xlu0 %v1136, 64
  %v1140 = vpop.permute.xlu0 %1139
  %v1142 = vmul.f32 %v1135, %v1140
  %1144 = vrot.lane.b32.xlu0 %v1142, 32
  %v1145 = vpop.permute.xlu0 %1144
  %v1147 = vadd.f32 %v1137, %v1145
  %v1148 = vtanh.pop %v1147
  %1150 = vrot.lane.b32.xlu0 %v1148, 64
  %v1151 = vpop.permute.xlu0 %1150
  %v1153 = vmul.f32 %v1135, %v1151
  %1155 = vrot.lane.b32.xlu0 %v1153, 32
  %v1156 = vpop.permute.xlu0 %1155
  %1158 = vst.msk [vmem:[#allocation3] sm:$0x3] %vm235, %v1156
  %v1159 = vld [vmem:[#allocation2 + $0x2] sm:$0x3]
  %v1160 = vsel %vm132, %v1156, 0
  %1162 = vmatprep.subr.mxu0 0.0
  %1163 = vmatpush1.msra.mxu0 0.0
  %1164 = vmatprep.subr.mxu0 0.0
  %1165 = vmatpush1.msra.mxu0 0.0
  %1166 = vmatprep.subr.mxu0 0.0
  %1167 = vmatpush1.msra.mxu0 0.0
  %1168 = vmatprep.subr.mxu0 0.0
  %1169 = vmatpush1.msra.mxu0 0.0
  %1170 = vmatprep.subr.mxu0 0.0
  %1171 = vmatpush1.msra.mxu0 0.0
  %1172 = vmatprep.subr.mxu0 0.0
  %1173 = vmatpush1.msra.mxu0 0.0
  %1174 = vmatprep.subr.mxu0 0.0
  %1175 = vmatpush1.msra.mxu0 0.0
  %1176 = vmatprep.subr.mxu0 0.0
  %1177 = vmatpush1.msra.mxu0 0.0
  %1178 = vmatprep.subr.mxu0 0.0
  %1179 = vmatpush1.msra.mxu0 0.0
  %1180 = vmatprep.subr.mxu0 0.0
  %1181 = vmatpush1.msra.mxu0 0.0
  %1182 = vmatprep.subr.mxu0 0.0
  %1183 = vmatpush1.msra.mxu0 0.0
  %1184 = vmatprep.subr.mxu0 0.0
  %1185 = vmatpush1.msra.mxu0 0.0
  %1186 = vmatprep.subr.mxu0 0.0
  %1187 = vmatpush1.msra.mxu0 %v1057
  %1188 = vmatprep.subr.mxu0 0.0
  %1189 = vmatpush1.msra.mxu0 %v1056
  %1190 = vmatprep.subr.mxu0 0.0
  %1191 = vmatpush1.msra.mxu0 %v1055
  %1192 = vmatprep.subr.mxu0 0.0
  %1193 = vmatpush1.msra.mxu0 %v1054
  %1194 = vmatprep.subr.mxu0 0.0
  %1195 = vmatpush2.msra.mxu0 0.0
  %1196 = vmatprep.subr.mxu0 0.0
  %1197 = vmatpush2.msra.mxu0 0.0
  %1198 = vmatprep.subr.mxu0 0.0
  %1199 = vmatpush2.msra.mxu0 0.0
  %1200 = vmatprep.subr.mxu0 0.0
  %1201 = vmatpush2.msra.mxu0 0.0
  %1202 = vmatprep.subr.mxu0 0.0
  %1203 = vmatpush2.msra.mxu0 0.0
  %1204 = vmatprep.subr.mxu0 0.0
  %1205 = vmatpush2.msra.mxu0 0.0
  %1206 = vmatprep.subr.mxu0 0.0
  %1207 = vmatpush2.msra.mxu0 0.0
  %1208 = vmatprep.subr.mxu0 0.0
  %1209 = vmatpush2.msra.mxu0 0.0
  %1210 = vmatprep.subr.mxu0 0.0
  %1211 = vmatpush2.msra.mxu0 0.0
  %1212 = vmatprep.subr.mxu0 0.0
  %1213 = vmatpush2.msra.mxu0 0.0
  %1214 = vmatprep.subr.mxu0 0.0
  %1215 = vmatpush2.msra.mxu0 0.0
  %1216 = vmatprep.subr.mxu0 0.0
  %1217 = vmatpush2.msra.mxu0 0.0
  %1218 = vmatprep.subr.mxu0 0.0
  %1219 = vmatpush2.msra.mxu0 0.0
  %1220 = vmatprep.subr.mxu0 0.0
  %1221 = vmatpush2.msra.mxu0 0.0
  %1222 = vmatprep.subr.mxu0 0.0
  %1223 = vmatpush2.msra.mxu0 0.0
  %1224 = vmatprep.subr.mxu0 0.0
  %1225 = vmatpush2.msra.mxu0 0.0
  %1226 = vmatprep.mubr.f32.mxu0 0.0
  %1227 = vmatmul.mubr.f32.gmra.mxu0 %v1160
  %v1228 = vpop.f32.mrf.mxu0
  %v1229 = vadd.f32 0.0, %v1228
  %v1230 = vpop.f32.mrf.mxu0
  %1231 = vdwg.mxu0
  %v1232 = vadd.f32 %v1159, %v1229
  %v1233 = vxor.u32 %v1232, 2147483648
  %v1234 = vmul.f32 %v1233, 1.442695
  %v1235 = vpow.pop %v1234
  %v1236 = vadd.f32 %v1235, 1.0
  %v1237 = vrcp.pop %v1236
  %v1238 = vmul.f32 1.0, %v1237
  %v1239 = vtanh.pop %v1232
  %v1240 = vmul.f32 %v1238, %v1147
  %1242 = vrot.lane.b32.xlu0 %v1239, 64
  %v1243 = vpop.permute.xlu0 %1242
  %v1245 = vmul.f32 %v1238, %v1243
  %1247 = vrot.lane.b32.xlu0 %v1245, 32
  %v1248 = vpop.permute.xlu0 %1247
  %v1250 = vadd.f32 %v1240, %v1248
  %v1251 = vtanh.pop %v1250
  %1253 = vrot.lane.b32.xlu0 %v1251, 64
  %v1254 = vpop.permute.xlu0 %1253
  %v1256 = vmul.f32 %v1238, %v1254
  %1258 = vrot.lane.b32.xlu0 %v1256, 32
  %v1259 = vpop.permute.xlu0 %1258
  %1261 = vst.msk [vmem:[#allocation3 + $0x2] sm:$0x3] %vm235, %v1259
  %v1262 = vld [vmem:[#allocation2 + $0x4] sm:$0x3]
  %v1263 = vsel %vm132, %v1259, 0
  %1265 = vmatprep.subr.mxu0 0.0
  %1266 = vmatpush1.msra.mxu0 0.0
  %1267 = vmatprep.subr.mxu0 0.0
  %1268 = vmatpush1.msra.mxu0 0.0
  %1269 = vmatprep.subr.mxu0 0.0
  %1270 = vmatpush1.msra.mxu0 0.0
  %1271 = vmatprep.subr.mxu0 0.0
  %1272 = vmatpush1.msra.mxu0 0.0
  %1273 = vmatprep.subr.mxu0 0.0
  %1274 = vmatpush1.msra.mxu0 0.0
  %1275 = vmatprep.subr.mxu0 0.0
  %1276 = vmatpush1.msra.mxu0 0.0
  %1277 = vmatprep.subr.mxu0 0.0
  %1278 = vmatpush1.msra.mxu0 0.0
  %1279 = vmatprep.subr.mxu0 0.0
  %1280 = vmatpush1.msra.mxu0 0.0
  %1281 = vmatprep.subr.mxu0 0.0
  %1282 = vmatpush1.msra.mxu0 0.0
  %1283 = vmatprep.subr.mxu0 0.0
  %1284 = vmatpush1.msra.mxu0 0.0
  %1285 = vmatprep.subr.mxu0 0.0
  %1286 = vmatpush1.msra.mxu0 0.0
  %1287 = vmatprep.subr.mxu0 0.0
  %1288 = vmatpush1.msra.mxu0 0.0
  %1289 = vmatprep.subr.mxu0 0.0
  %1290 = vmatpush1.msra.mxu0 %v1057
  %1291 = vmatprep.subr.mxu0 0.0
  %1292 = vmatpush1.msra.mxu0 %v1056
  %1293 = vmatprep.subr.mxu0 0.0
  %1294 = vmatpush1.msra.mxu0 %v1055
  %1295 = vmatprep.subr.mxu0 0.0
  %1296 = vmatpush1.msra.mxu0 %v1054
  %1297 = vmatprep.subr.mxu0 0.0
  %1298 = vmatpush2.msra.mxu0 0.0
  %1299 = vmatprep.subr.mxu0 0.0
  %1300 = vmatpush2.msra.mxu0 0.0
  %1301 = vmatprep.subr.mxu0 0.0
  %1302 = vmatpush2.msra.mxu0 0.0
  %1303 = vmatprep.subr.mxu0 0.0
  %1304 = vmatpush2.msra.mxu0 0.0
  %1305 = vmatprep.subr.mxu0 0.0
  %1306 = vmatpush2.msra.mxu0 0.0
  %1307 = vmatprep.subr.mxu0 0.0
  %1308 = vmatpush2.msra.mxu0 0.0
  %1309 = vmatprep.subr.mxu0 0.0
  %1310 = vmatpush2.msra.mxu0 0.0
  %1311 = vmatprep.subr.mxu0 0.0
  %1312 = vmatpush2.msra.mxu0 0.0
  %1313 = vmatprep.subr.mxu0 0.0
  %1314 = vmatpush2.msra.mxu0 0.0
  %1315 = vmatprep.subr.mxu0 0.0
  %1316 = vmatpush2.msra.mxu0 0.0
  %1317 = vmatprep.subr.mxu0 0.0
  %1318 = vmatpush2.msra.mxu0 0.0
  %1319 = vmatprep.subr.mxu0 0.0
  %1320 = vmatpush2.msra.mxu0 0.0
  %1321 = vmatprep.subr.mxu0 0.0
  %1322 = vmatpush2.msra.mxu0 0.0
  %1323 = vmatprep.subr.mxu0 0.0
  %1324 = vmatpush2.msra.mxu0 0.0
  %1325 = vmatprep.subr.mxu0 0.0
  %1326 = vmatpush2.msra.mxu0 0.0
  %1327 = vmatprep.subr.mxu0 0.0
  %1328 = vmatpush2.msra.mxu0 0.0
  %1329 = vmatprep.mubr.f32.mxu0 0.0
  %1330 = vmatmul.mubr.f32.gmra.mxu0 %v1263
  %v1331 = vpop.f32.mrf.mxu0
  %v1332 = vadd.f32 0.0, %v1331
  %v1333 = vpop.f32.mrf.mxu0
  %1334 = vdwg.mxu0
  %v1335 = vadd.f32 %v1262, %v1332
  %v1336 = vxor.u32 %v1335, 2147483648
  %v1337 = vmul.f32 %v1336, 1.442695
  %v1338 = vpow.pop %v1337
  %v1339 = vadd.f32 %v1338, 1.0
  %v1340 = vrcp.pop %v1339
  %v1341 = vmul.f32 1.0, %v1340
  %v1342 = vtanh.pop %v1335
  %v1343 = vmul.f32 %v1341, %v1250
  %1345 = vrot.lane.b32.xlu0 %v1342, 64
  %v1346 = vpop.permute.xlu0 %1345
  %v1348 = vmul.f32 %v1341, %v1346
  %1350 = vrot.lane.b32.xlu0 %v1348, 32
  %v1351 = vpop.permute.xlu0 %1350
  %v1353 = vadd.f32 %v1343, %v1351
  %v1354 = vtanh.pop %v1353
  %1356 = vrot.lane.b32.xlu0 %v1354, 64
  %v1357 = vpop.permute.xlu0 %1356
  %v1359 = vmul.f32 %v1341, %v1357
  %1361 = vrot.lane.b32.xlu0 %v1359, 32
  %v1362 = vpop.permute.xlu0 %1361
  %1364 = vst.msk [vmem:[#allocation3 + $0x4] sm:$0x3] %vm235, %v1362
  %v1365 = vld [vmem:[#allocation2 + $0x6] sm:$0x3]
  %v1366 = vsel %vm132, %v1362, 0
  %1368 = vmatprep.subr.mxu0 0.0
  %1369 = vmatpush1.msra.mxu0 0.0
  %1370 = vmatprep.subr.mxu0 0.0
  %1371 = vmatpush1.msra.mxu0 0.0
  %1372 = vmatprep.subr.mxu0 0.0
  %1373 = vmatpush1.msra.mxu0 0.0
  %1374 = vmatprep.subr.mxu0 0.0
  %1375 = vmatpush1.msra.mxu0 0.0
  %1376 = vmatprep.subr.mxu0 0.0
  %1377 = vmatpush1.msra.mxu0 0.0
  %1378 = vmatprep.subr.mxu0 0.0
  %1379 = vmatpush1.msra.mxu0 0.0
  %1380 = vmatprep.subr.mxu0 0.0
  %1381 = vmatpush1.msra.mxu0 0.0
  %1382 = vmatprep.subr.mxu0 0.0
  %1383 = vmatpush1.msra.mxu0 0.0
  %1384 = vmatprep.subr.mxu0 0.0
  %1385 = vmatpush1.msra.mxu0 0.0
  %1386 = vmatprep.subr.mxu0 0.0
  %1387 = vmatpush1.msra.mxu0 0.0
  %1388 = vmatprep.subr.mxu0 0.0
  %1389 = vmatpush1.msra.mxu0 0.0
  %1390 = vmatprep.subr.mxu0 0.0
  %1391 = vmatpush1.msra.mxu0 0.0
  %1392 = vmatprep.subr.mxu0 0.0
  %1393 = vmatpush1.msra.mxu0 %v1057
  %1394 = vmatprep.subr.mxu0 0.0
  %1395 = vmatpush1.msra.mxu0 %v1056
  %1396 = vmatprep.subr.mxu0 0.0
  %1397 = vmatpush1.msra.mxu0 %v1055
  %1398 = vmatprep.subr.mxu0 0.0
  %1399 = vmatpush1.msra.mxu0 %v1054
  %1400 = vmatprep.subr.mxu0 0.0
  %1401 = vmatpush2.msra.mxu0 0.0
  %1402 = vmatprep.subr.mxu0 0.0
  %1403 = vmatpush2.msra.mxu0 0.0
  %1404 = vmatprep.subr.mxu0 0.0
  %1405 = vmatpush2.msra.mxu0 0.0
  %1406 = vmatprep.subr.mxu0 0.0
  %1407 = vmatpush2.msra.mxu0 0.0
  %1408 = vmatprep.subr.mxu0 0.0
  %1409 = vmatpush2.msra.mxu0 0.0
  %1410 = vmatprep.subr.mxu0 0.0
  %1411 = vmatpush2.msra.mxu0 0.0
  %1412 = vmatprep.subr.mxu0 0.0
  %1413 = vmatpush2.msra.mxu0 0.0
  %1414 = vmatprep.subr.mxu0 0.0
  %1415 = vmatpush2.msra.mxu0 0.0
  %1416 = vmatprep.subr.mxu0 0.0
  %1417 = vmatpush2.msra.mxu0 0.0
  %1418 = vmatprep.subr.mxu0 0.0
  %1419 = vmatpush2.msra.mxu0 0.0
  %1420 = vmatprep.subr.mxu0 0.0
  %1421 = vmatpush2.msra.mxu0 0.0
  %1422 = vmatprep.subr.mxu0 0.0
  %1423 = vmatpush2.msra.mxu0 0.0
  %1424 = vmatprep.subr.mxu0 0.0
  %1425 = vmatpush2.msra.mxu0 0.0
  %1426 = vmatprep.subr.mxu0 0.0
  %1427 = vmatpush2.msra.mxu0 0.0
  %1428 = vmatprep.subr.mxu0 0.0
  %1429 = vmatpush2.msra.mxu0 0.0
  %1430 = vmatprep.subr.mxu0 0.0
  %1431 = vmatpush2.msra.mxu0 0.0
  %1432 = vmatprep.mubr.f32.mxu0 0.0
  %1433 = vmatmul.mubr.f32.gmra.mxu0 %v1366
  %v1434 = vpop.f32.mrf.mxu0
  %v1435 = vadd.f32 0.0, %v1434
  %v1436 = vpop.f32.mrf.mxu0
  %1437 = vdwg.mxu0
  %v1438 = vadd.f32 %v1365, %v1435
  %v1439 = vxor.u32 %v1438, 2147483648
  %v1440 = vmul.f32 %v1439, 1.442695
  %v1441 = vpow.pop %v1440
  %v1442 = vadd.f32 %v1441, 1.0
  %v1443 = vrcp.pop %v1442
  %v1444 = vmul.f32 1.0, %v1443
  %v1445 = vtanh.pop %v1438
  %v1446 = vmul.f32 %v1444, %v1353
  %1448 = vrot.lane.b32.xlu0 %v1445, 64
  %v1449 = vpop.permute.xlu0 %1448
  %v1451 = vmul.f32 %v1444, %v1449
  %1453 = vrot.lane.b32.xlu0 %v1451, 32
  %v1454 = vpop.permute.xlu0 %1453
  %v1456 = vadd.f32 %v1446, %v1454
  %v1457 = vtanh.pop %v1456
  %1459 = vrot.lane.b32.xlu0 %v1457, 64
  %v1460 = vpop.permute.xlu0 %1459
  %v1462 = vmul.f32 %v1444, %v1460
  %1464 = vrot.lane.b32.xlu0 %v1462, 32
  %v1465 = vpop.permute.xlu0 %1464
  %1467 = vst.msk [vmem:[#allocation3 + $0x6] sm:$0x3] %vm235, %v1465
  %v1468 = vld [vmem:[#allocation2 + $0x8] sm:$0x3]
  %v1469 = vsel %vm132, %v1465, 0
  %1471 = vmatprep.subr.mxu0 0.0
  %1472 = vmatpush1.msra.mxu0 0.0
  %1473 = vmatprep.subr.mxu0 0.0
  %1474 = vmatpush1.msra.mxu0 0.0
  %1475 = vmatprep.subr.mxu0 0.0
  %1476 = vmatpush1.msra.mxu0 0.0
  %1477 = vmatprep.subr.mxu0 0.0
  %1478 = vmatpush1.msra.mxu0 0.0
  %1479 = vmatprep.subr.mxu0 0.0
  %1480 = vmatpush1.msra.mxu0 0.0
  %1481 = vmatprep.subr.mxu0 0.0
  %1482 = vmatpush1.msra.mxu0 0.0
  %1483 = vmatprep.subr.mxu0 0.0
  %1484 = vmatpush1.msra.mxu0 0.0
  %1485 = vmatprep.subr.mxu0 0.0
  %1486 = vmatpush1.msra.mxu0 0.0
  %1487 = vmatprep.subr.mxu0 0.0
  %1488 = vmatpush1.msra.mxu0 0.0
  %1489 = vmatprep.subr.mxu0 0.0
  %1490 = vmatpush1.msra.mxu0 0.0
  %1491 = vmatprep.subr.mxu0 0.0
  %1492 = vmatpush1.msra.mxu0 0.0
  %1493 = vmatprep.subr.mxu0 0.0
  %1494 = vmatpush1.msra.mxu0 0.0
  %1495 = vmatprep.subr.mxu0 0.0
  %1496 = vmatpush1.msra.mxu0 %v1057
  %1497 = vmatprep.subr.mxu0 0.0
  %1498 = vmatpush1.msra.mxu0 %v1056
  %1499 = vmatprep.subr.mxu0 0.0
  %1500 = vmatpush1.msra.mxu0 %v1055
  %1501 = vmatprep.subr.mxu0 0.0
  %1502 = vmatpush1.msra.mxu0 %v1054
  %1503 = vmatprep.subr.mxu0 0.0
  %1504 = vmatpush2.msra.mxu0 0.0
  %1505 = vmatprep.subr.mxu0 0.0
  %1506 = vmatpush2.msra.mxu0 0.0
  %1507 = vmatprep.subr.mxu0 0.0
  %1508 = vmatpush2.msra.mxu0 0.0
  %1509 = vmatprep.subr.mxu0 0.0
  %1510 = vmatpush2.msra.mxu0 0.0
  %1511 = vmatprep.subr.mxu0 0.0
  %1512 = vmatpush2.msra.mxu0 0.0
  %1513 = vmatprep.subr.mxu0 0.0
  %1514 = vmatpush2.msra.mxu0 0.0
  %1515 = vmatprep.subr.mxu0 0.0
  %1516 = vmatpush2.msra.mxu0 0.0
  %1517 = vmatprep.subr.mxu0 0.0
  %1518 = vmatpush2.msra.mxu0 0.0
  %1519 = vmatprep.subr.mxu0 0.0
  %1520 = vmatpush2.msra.mxu0 0.0
  %1521 = vmatprep.subr.mxu0 0.0
  %1522 = vmatpush2.msra.mxu0 0.0
  %1523 = vmatprep.subr.mxu0 0.0
  %1524 = vmatpush2.msra.mxu0 0.0
  %1525 = vmatprep.subr.mxu0 0.0
  %1526 = vmatpush2.msra.mxu0 0.0
  %1527 = vmatprep.subr.mxu0 0.0
  %1528 = vmatpush2.msra.mxu0 0.0
  %1529 = vmatprep.subr.mxu0 0.0
  %1530 = vmatpush2.msra.mxu0 0.0
  %1531 = vmatprep.subr.mxu0 0.0
  %1532 = vmatpush2.msra.mxu0 0.0
  %1533 = vmatprep.subr.mxu0 0.0
  %1534 = vmatpush2.msra.mxu0 0.0
  %1535 = vmatprep.mubr.f32.mxu0 0.0
  %1536 = vmatmul.mubr.f32.gmra.mxu0 %v1469
  %v1537 = vpop.f32.mrf.mxu0
  %v1538 = vadd.f32 0.0, %v1537
  %v1539 = vpop.f32.mrf.mxu0
  %1540 = vdwg.mxu0
  %v1541 = vadd.f32 %v1468, %v1538
  %v1542 = vxor.u32 %v1541, 2147483648
  %v1543 = vmul.f32 %v1542, 1.442695
  %v1544 = vpow.pop %v1543
  %v1545 = vadd.f32 %v1544, 1.0
  %v1546 = vrcp.pop %v1545
  %v1547 = vmul.f32 1.0, %v1546
  %v1548 = vtanh.pop %v1541
  %v1549 = vmul.f32 %v1547, %v1456
  %1551 = vrot.lane.b32.xlu0 %v1548, 64
  %v1552 = vpop.permute.xlu0 %1551
  %v1554 = vmul.f32 %v1547, %v1552
  %1556 = vrot.lane.b32.xlu0 %v1554, 32
  %v1557 = vpop.permute.xlu0 %1556
  %v1559 = vadd.f32 %v1549, %v1557
  %v1560 = vtanh.pop %v1559
  %1562 = vrot.lane.b32.xlu0 %v1560, 64
  %v1563 = vpop.permute.xlu0 %1562
  %v1565 = vmul.f32 %v1547, %v1563
  %1567 = vrot.lane.b32.xlu0 %v1565, 32
  %v1568 = vpop.permute.xlu0 %1567
  %1570 = vst.msk [vmem:[#allocation3 + $0x8] sm:$0x3] %vm235, %v1568
  %v1571 = vld [vmem:[#allocation2 + $0xa] sm:$0x3]
  %v1572 = vsel %vm132, %v1568, 0
  %1574 = vmatprep.subr.mxu0 0.0
  %1575 = vmatpush1.msra.mxu0 0.0
  %1576 = vmatprep.subr.mxu0 0.0
  %1577 = vmatpush1.msra.mxu0 0.0
  %1578 = vmatprep.subr.mxu0 0.0
  %1579 = vmatpush1.msra.mxu0 0.0
  %1580 = vmatprep.subr.mxu0 0.0
  %1581 = vmatpush1.msra.mxu0 0.0
  %1582 = vmatprep.subr.mxu0 0.0
  %1583 = vmatpush1.msra.mxu0 0.0
  %1584 = vmatprep.subr.mxu0 0.0
  %1585 = vmatpush1.msra.mxu0 0.0
  %1586 = vmatprep.subr.mxu0 0.0
  %1587 = vmatpush1.msra.mxu0 0.0
  %1588 = vmatprep.subr.mxu0 0.0
  %1589 = vmatpush1.msra.mxu0 0.0
  %1590 = vmatprep.subr.mxu0 0.0
  %1591 = vmatpush1.msra.mxu0 0.0
  %1592 = vmatprep.subr.mxu0 0.0
  %1593 = vmatpush1.msra.mxu0 0.0
  %1594 = vmatprep.subr.mxu0 0.0
  %1595 = vmatpush1.msra.mxu0 0.0
  %1596 = vmatprep.subr.mxu0 0.0
  %1597 = vmatpush1.msra.mxu0 0.0
  %1598 = vmatprep.subr.mxu0 0.0
  %1599 = vmatpush1.msra.mxu0 %v1057
  %1600 = vmatprep.subr.mxu0 0.0
  %1601 = vmatpush1.msra.mxu0 %v1056
  %1602 = vmatprep.subr.mxu0 0.0
  %1603 = vmatpush1.msra.mxu0 %v1055
  %1604 = vmatprep.subr.mxu0 0.0
  %1605 = vmatpush1.msra.mxu0 %v1054
  %1606 = vmatprep.subr.mxu0 0.0
  %1607 = vmatpush2.msra.mxu0 0.0
  %1608 = vmatprep.subr.mxu0 0.0
  %1609 = vmatpush2.msra.mxu0 0.0
  %1610 = vmatprep.subr.mxu0 0.0
  %1611 = vmatpush2.msra.mxu0 0.0
  %1612 = vmatprep.subr.mxu0 0.0
  %1613 = vmatpush2.msra.mxu0 0.0
  %1614 = vmatprep.subr.mxu0 0.0
  %1615 = vmatpush2.msra.mxu0 0.0
  %1616 = vmatprep.subr.mxu0 0.0
  %1617 = vmatpush2.msra.mxu0 0.0
  %1618 = vmatprep.subr.mxu0 0.0
  %1619 = vmatpush2.msra.mxu0 0.0
  %1620 = vmatprep.subr.mxu0 0.0
  %1621 = vmatpush2.msra.mxu0 0.0
  %1622 = vmatprep.subr.mxu0 0.0
  %1623 = vmatpush2.msra.mxu0 0.0
  %1624 = vmatprep.subr.mxu0 0.0
  %1625 = vmatpush2.msra.mxu0 0.0
  %1626 = vmatprep.subr.mxu0 0.0
  %1627 = vmatpush2.msra.mxu0 0.0
  %1628 = vmatprep.subr.mxu0 0.0
  %1629 = vmatpush2.msra.mxu0 0.0
  %1630 = vmatprep.subr.mxu0 0.0
  %1631 = vmatpush2.msra.mxu0 0.0
  %1632 = vmatprep.subr.mxu0 0.0
  %1633 = vmatpush2.msra.mxu0 0.0
  %1634 = vmatprep.subr.mxu0 0.0
  %1635 = vmatpush2.msra.mxu0 0.0
  %1636 = vmatprep.subr.mxu0 0.0
  %1637 = vmatpush2.msra.mxu0 0.0
  %1638 = vmatprep.mubr.f32.mxu0 0.0
  %1639 = vmatmul.mubr.f32.gmra.mxu0 %v1572
  %v1640 = vpop.f32.mrf.mxu0
  %v1641 = vadd.f32 0.0, %v1640
  %v1642 = vpop.f32.mrf.mxu0
  %1643 = vdwg.mxu0
  %v1644 = vadd.f32 %v1571, %v1641
  %v1645 = vxor.u32 %v1644, 2147483648
  %v1646 = vmul.f32 %v1645, 1.442695
  %v1647 = vpow.pop %v1646
  %v1648 = vadd.f32 %v1647, 1.0
  %v1649 = vrcp.pop %v1648
  %v1650 = vmul.f32 1.0, %v1649
  %v1651 = vtanh.pop %v1644
  %v1652 = vmul.f32 %v1650, %v1559
  %1654 = vrot.lane.b32.xlu0 %v1651, 64
  %v1655 = vpop.permute.xlu0 %1654
  %v1657 = vmul.f32 %v1650, %v1655
  %1659 = vrot.lane.b32.xlu0 %v1657, 32
  %v1660 = vpop.permute.xlu0 %1659
  %v1662 = vadd.f32 %v1652, %v1660
  %v1663 = vtanh.pop %v1662
  %1665 = vrot.lane.b32.xlu0 %v1663, 64
  %v1666 = vpop.permute.xlu0 %1665
  %v1668 = vmul.f32 %v1650, %v1666
  %1670 = vrot.lane.b32.xlu0 %v1668, 32
  %v1671 = vpop.permute.xlu0 %1670
  %1673 = vst.msk [vmem:[#allocation3 + $0xa] sm:$0x3] %vm235, %v1671
  %v1674 = vld [vmem:[#allocation2 + $0xc] sm:$0x3]
  %v1675 = vsel %vm132, %v1671, 0
  %1677 = vmatprep.subr.mxu0 0.0
  %1678 = vmatpush1.msra.mxu0 0.0
  %1679 = vmatprep.subr.mxu0 0.0
  %1680 = vmatpush1.msra.mxu0 0.0
  %1681 = vmatprep.subr.mxu0 0.0
  %1682 = vmatpush1.msra.mxu0 0.0
  %1683 = vmatprep.subr.mxu0 0.0
  %1684 = vmatpush1.msra.mxu0 0.0
  %1685 = vmatprep.subr.mxu0 0.0
  %1686 = vmatpush1.msra.mxu0 0.0
  %1687 = vmatprep.subr.mxu0 0.0
  %1688 = vmatpush1.msra.mxu0 0.0
  %1689 = vmatprep.subr.mxu0 0.0
  %1690 = vmatpush1.msra.mxu0 0.0
  %1691 = vmatprep.subr.mxu0 0.0
  %1692 = vmatpush1.msra.mxu0 0.0
  %1693 = vmatprep.subr.mxu0 0.0
  %1694 = vmatpush1.msra.mxu0 0.0
  %1695 = vmatprep.subr.mxu0 0.0
  %1696 = vmatpush1.msra.mxu0 0.0
  %1697 = vmatprep.subr.mxu0 0.0
  %1698 = vmatpush1.msra.mxu0 0.0
  %1699 = vmatprep.subr.mxu0 0.0
  %1700 = vmatpush1.msra.mxu0 0.0
  %1701 = vmatprep.subr.mxu0 0.0
  %1702 = vmatpush1.msra.mxu0 %v1057
  %1703 = vmatprep.subr.mxu0 0.0
  %1704 = vmatpush1.msra.mxu0 %v1056
  %1705 = vmatprep.subr.mxu0 0.0
  %1706 = vmatpush1.msra.mxu0 %v1055
  %1707 = vmatprep.subr.mxu0 0.0
  %1708 = vmatpush1.msra.mxu0 %v1054
  %1709 = vmatprep.subr.mxu0 0.0
  %1710 = vmatpush2.msra.mxu0 0.0
  %1711 = vmatprep.subr.mxu0 0.0
  %1712 = vmatpush2.msra.mxu0 0.0
  %1713 = vmatprep.subr.mxu0 0.0
  %1714 = vmatpush2.msra.mxu0 0.0
  %1715 = vmatprep.subr.mxu0 0.0
  %1716 = vmatpush2.msra.mxu0 0.0
  %1717 = vmatprep.subr.mxu0 0.0
  %1718 = vmatpush2.msra.mxu0 0.0
  %1719 = vmatprep.subr.mxu0 0.0
  %1720 = vmatpush2.msra.mxu0 0.0
  %1721 = vmatprep.subr.mxu0 0.0
  %1722 = vmatpush2.msra.mxu0 0.0
  %1723 = vmatprep.subr.mxu0 0.0
  %1724 = vmatpush2.msra.mxu0 0.0
  %1725 = vmatprep.subr.mxu0 0.0
  %1726 = vmatpush2.msra.mxu0 0.0
  %1727 = vmatprep.subr.mxu0 0.0
  %1728 = vmatpush2.msra.mxu0 0.0
  %1729 = vmatprep.subr.mxu0 0.0
  %1730 = vmatpush2.msra.mxu0 0.0
  %1731 = vmatprep.subr.mxu0 0.0
  %1732 = vmatpush2.msra.mxu0 0.0
  %1733 = vmatprep.subr.mxu0 0.0
  %1734 = vmatpush2.msra.mxu0 0.0
  %1735 = vmatprep.subr.mxu0 0.0
  %1736 = vmatpush2.msra.mxu0 0.0
  %1737 = vmatprep.subr.mxu0 0.0
  %1738 = vmatpush2.msra.mxu0 0.0
  %1739 = vmatprep.subr.mxu0 0.0
  %1740 = vmatpush2.msra.mxu0 0.0
  %1741 = vmatprep.mubr.f32.mxu0 0.0
  %1742 = vmatmul.mubr.f32.gmra.mxu0 %v1675
  %v1743 = vpop.f32.mrf.mxu0
  %v1744 = vadd.f32 0.0, %v1743
  %v1745 = vpop.f32.mrf.mxu0
  %1746 = vdwg.mxu0
  %v1747 = vadd.f32 %v1674, %v1744
  %v1748 = vxor.u32 %v1747, 2147483648
  %v1749 = vmul.f32 %v1748, 1.442695
  %v1750 = vpow.pop %v1749
  %v1751 = vadd.f32 %v1750, 1.0
  %v1752 = vrcp.pop %v1751
  %v1753 = vmul.f32 1.0, %v1752
  %v1754 = vtanh.pop %v1747
  %v1755 = vmul.f32 %v1753, %v1662
  %1757 = vrot.lane.b32.xlu0 %v1754, 64
  %v1758 = vpop.permute.xlu0 %1757
  %v1760 = vmul.f32 %v1753, %v1758
  %1762 = vrot.lane.b32.xlu0 %v1760, 32
  %v1763 = vpop.permute.xlu0 %1762
  %v1765 = vadd.f32 %v1755, %v1763
  %v1766 = vtanh.pop %v1765
  %1768 = vrot.lane.b32.xlu0 %v1766, 64
  %v1769 = vpop.permute.xlu0 %1768
  %v1771 = vmul.f32 %v1753, %v1769
  %1773 = vrot.lane.b32.xlu0 %v1771, 32
  %v1774 = vpop.permute.xlu0 %1773
  %1776 = vst.msk [vmem:[#allocation3 + $0xc] sm:$0x3] %vm235, %v1774
  %v1777 = vld [vmem:[#allocation2 + $0xe] sm:$0x3]
  %v1778 = vsel %vm132, %v1774, 0
  %1780 = vmatprep.subr.mxu0 0.0
  %1781 = vmatpush1.msra.mxu0 0.0
  %1782 = vmatprep.subr.mxu0 0.0
  %1783 = vmatpush1.msra.mxu0 0.0
  %1784 = vmatprep.subr.mxu0 0.0
  %1785 = vmatpush1.msra.mxu0 0.0
  %1786 = vmatprep.subr.mxu0 0.0
  %1787 = vmatpush1.msra.mxu0 0.0
  %1788 = vmatprep.subr.mxu0 0.0
  %1789 = vmatpush1.msra.mxu0 0.0
  %1790 = vmatprep.subr.mxu0 0.0
  %1791 = vmatpush1.msra.mxu0 0.0
  %1792 = vmatprep.subr.mxu0 0.0
  %1793 = vmatpush1.msra.mxu0 0.0
  %1794 = vmatprep.subr.mxu0 0.0
  %1795 = vmatpush1.msra.mxu0 0.0
  %1796 = vmatprep.subr.mxu0 0.0
  %1797 = vmatpush1.msra.mxu0 0.0
  %1798 = vmatprep.subr.mxu0 0.0
  %1799 = vmatpush1.msra.mxu0 0.0
  %1800 = vmatprep.subr.mxu0 0.0
  %1801 = vmatpush1.msra.mxu0 0.0
  %1802 = vmatprep.subr.mxu0 0.0
  %1803 = vmatpush1.msra.mxu0 0.0
  %1804 = vmatprep.subr.mxu0 0.0
  %1805 = vmatpush1.msra.mxu0 %v1057
  %1806 = vmatprep.subr.mxu0 0.0
  %1807 = vmatpush1.msra.mxu0 %v1056
  %1808 = vmatprep.subr.mxu0 0.0
  %1809 = vmatpush1.msra.mxu0 %v1055
  %1810 = vmatprep.subr.mxu0 0.0
  %1811 = vmatpush1.msra.mxu0 %v1054
  %1812 = vmatprep.subr.mxu0 0.0
  %1813 = vmatpush2.msra.mxu0 0.0
  %1814 = vmatprep.subr.mxu0 0.0
  %1815 = vmatpush2.msra.mxu0 0.0
  %1816 = vmatprep.subr.mxu0 0.0
  %1817 = vmatpush2.msra.mxu0 0.0
  %1818 = vmatprep.subr.mxu0 0.0
  %1819 = vmatpush2.msra.mxu0 0.0
  %1820 = vmatprep.subr.mxu0 0.0
  %1821 = vmatpush2.msra.mxu0 0.0
  %1822 = vmatprep.subr.mxu0 0.0
  %1823 = vmatpush2.msra.mxu0 0.0
  %1824 = vmatprep.subr.mxu0 0.0
  %1825 = vmatpush2.msra.mxu0 0.0
  %1826 = vmatprep.subr.mxu0 0.0
  %1827 = vmatpush2.msra.mxu0 0.0
  %1828 = vmatprep.subr.mxu0 0.0
  %1829 = vmatpush2.msra.mxu0 0.0
  %1830 = vmatprep.subr.mxu0 0.0
  %1831 = vmatpush2.msra.mxu0 0.0
  %1832 = vmatprep.subr.mxu0 0.0
  %1833 = vmatpush2.msra.mxu0 0.0
  %1834 = vmatprep.subr.mxu0 0.0
  %1835 = vmatpush2.msra.mxu0 0.0
  %1836 = vmatprep.subr.mxu0 0.0
  %1837 = vmatpush2.msra.mxu0 0.0
  %1838 = vmatprep.subr.mxu0 0.0
  %1839 = vmatpush2.msra.mxu0 0.0
  %1840 = vmatprep.subr.mxu0 0.0
  %1841 = vmatpush2.msra.mxu0 0.0
  %1842 = vmatprep.subr.mxu0 0.0
  %1843 = vmatpush2.msra.mxu0 0.0
  %1844 = vmatprep.mubr.f32.mxu0 0.0
  %1845 = vmatmul.mubr.f32.gmra.mxu0 %v1778
  %v1846 = vpop.f32.mrf.mxu0
  %v1847 = vadd.f32 0.0, %v1846
  %v1848 = vpop.f32.mrf.mxu0
  %1849 = vdwg.mxu0
  %v1850 = vadd.f32 %v1777, %v1847
  %v1851 = vxor.u32 %v1850, 2147483648
  %v1852 = vmul.f32 %v1851, 1.442695
  %v1853 = vpow.pop %v1852
  %v1854 = vadd.f32 %v1853, 1.0
  %v1855 = vrcp.pop %v1854
  %v1856 = vmul.f32 1.0, %v1855
  %v1857 = vtanh.pop %v1850
  %v1858 = vmul.f32 %v1856, %v1765
  %1860 = vrot.lane.b32.xlu0 %v1857, 64
  %v1861 = vpop.permute.xlu0 %1860
  %v1863 = vmul.f32 %v1856, %v1861
  %1865 = vrot.lane.b32.xlu0 %v1863, 32
  %v1866 = vpop.permute.xlu0 %1865
  %v1868 = vadd.f32 %v1858, %v1866
  %v1869 = vtanh.pop %v1868
  %1871 = vrot.lane.b32.xlu0 %v1869, 64
  %v1872 = vpop.permute.xlu0 %1871
  %v1874 = vmul.f32 %v1856, %v1872
  %1876 = vrot.lane.b32.xlu0 %v1874, 32
  %v1877 = vpop.permute.xlu0 %1876
  %1879 = vst.msk [vmem:[#allocation3 + $0xe] sm:$0x3] %vm235, %v1877
  %v1880 = vld [vmem:[#allocation3] sm:$0xff]
  %v1881 = vld [vmem:[#allocation3 + $0x8] sm:$0xff]
  %v1882 = vld [vmem:[%s7] sm:$0xff]
  %v1883 = vld [vmem:[%s7 + $0x8] sm:$0xff]
  %v1884 = vld [vmem:[%s7 + $0x10] sm:$0xff]
  %v1885 = vld [vmem:[%s7 + $0x18] sm:$0xff]
  %v1886 = vld [vmem:[%s8] sm:$0x1]
  %v1888 = vlaneseq
  %v1889 = vshrl.u32 %v1888, 7
  %v1890 = vsub.s32 0, %v1889
  %v1891 = vrot.slane %v1886, %v1890
  %v1894 = vsel %vm132, %v1880, 0
  %v1897 = vsel %vm132, %v1881, 0
  %1899 = vmatprep.subr.mxu0 0.0
  %1900 = vmatpush1.msra.mxu0 0.0
  %1901 = vmatprep.subr.mxu0 0.0
  %1902 = vmatpush1.msra.mxu0 0.0
  %1903 = vmatprep.subr.mxu0 0.0
  %1904 = vmatpush1.msra.mxu0 0.0
  %1905 = vmatprep.subr.mxu0 0.0
  %1906 = vmatpush1.msra.mxu0 0.0
  %1907 = vmatprep.subr.mxu0 0.0
  %1908 = vmatpush1.msra.mxu0 0.0
  %1909 = vmatprep.subr.mxu0 0.0
  %1910 = vmatpush1.msra.mxu0 0.0
  %1911 = vmatprep.subr.mxu0 0.0
  %1912 = vmatpush1.msra.mxu0 0.0
  %1913 = vmatprep.subr.mxu0 0.0
  %1914 = vmatpush1.msra.mxu0 0.0
  %1915 = vmatprep.subr.mxu0 0.0
  %1916 = vmatpush1.msra.mxu0 0.0
  %1917 = vmatprep.subr.mxu0 0.0
  %1918 = vmatpush1.msra.mxu0 0.0
  %1919 = vmatprep.subr.mxu0 0.0
  %1920 = vmatpush1.msra.mxu0 0.0
  %1921 = vmatprep.subr.mxu0 0.0
  %1922 = vmatpush1.msra.mxu0 0.0
  %1923 = vmatprep.subr.mxu0 0.0
  %1924 = vmatpush1.msra.mxu0 %v1885
  %1925 = vmatprep.subr.mxu0 0.0
  %1926 = vmatpush1.msra.mxu0 %v1884
  %1927 = vmatprep.subr.mxu0 0.0
  %1928 = vmatpush1.msra.mxu0 %v1883
  %1929 = vmatprep.subr.mxu0 0.0
  %1930 = vmatpush1.msra.mxu0 %v1882
  %1931 = vmatprep.subr.mxu0 0.0
  %1932 = vmatpush2.msra.mxu0 0.0
  %1933 = vmatprep.subr.mxu0 0.0
  %1934 = vmatpush2.msra.mxu0 0.0
  %1935 = vmatprep.subr.mxu0 0.0
  %1936 = vmatpush2.msra.mxu0 0.0
  %1937 = vmatprep.subr.mxu0 0.0
  %1938 = vmatpush2.msra.mxu0 0.0
  %1939 = vmatprep.subr.mxu0 0.0
  %1940 = vmatpush2.msra.mxu0 0.0
  %1941 = vmatprep.subr.mxu0 0.0
  %1942 = vmatpush2.msra.mxu0 0.0
  %1943 = vmatprep.subr.mxu0 0.0
  %1944 = vmatpush2.msra.mxu0 0.0
  %1945 = vmatprep.subr.mxu0 0.0
  %1946 = vmatpush2.msra.mxu0 0.0
  %1947 = vmatprep.subr.mxu0 0.0
  %1948 = vmatpush2.msra.mxu0 0.0
  %1949 = vmatprep.subr.mxu0 0.0
  %1950 = vmatpush2.msra.mxu0 0.0
  %1951 = vmatprep.subr.mxu0 0.0
  %1952 = vmatpush2.msra.mxu0 0.0
  %1953 = vmatprep.subr.mxu0 0.0
  %1954 = vmatpush2.msra.mxu0 0.0
  %1955 = vmatprep.subr.mxu0 0.0
  %1956 = vmatpush2.msra.mxu0 0.0
  %1957 = vmatprep.subr.mxu0 0.0
  %1958 = vmatpush2.msra.mxu0 0.0
  %1959 = vmatprep.subr.mxu0 0.0
  %1960 = vmatpush2.msra.mxu0 0.0
  %1961 = vmatprep.subr.mxu0 0.0
  %1962 = vmatpush2.msra.mxu0 0.0
  %1963 = vmatprep.mubr.f32.mxu0 0.0
  %1964 = vmatmul.mubr.f32.gmra.mxu0 %v1894
  %v1965 = vpop.f32.mrf.mxu0
  %v1966 = vadd.f32 %v1891, %v1965
  %v1967 = vpop.f32.mrf.mxu0
  %1968 = vmatprep.mubr.f32.mxu0 0.0
  %1969 = vmatmul.mubr.f32.gmra.mxu0 %v1897
  %v1970 = vpop.f32.mrf.mxu0
  %v1971 = vadd.f32 %v1891, %v1970
  %v1972 = vpop.f32.mrf.mxu0
  %1973 = vdwg.mxu0
  %1974 = vst [vmem:[%s9] sm:$0xff] %v1966
  %1975 = vst [vmem:[%s9 + $0x8] sm:$0xff] %v1971
  // Predicated region
  $region38: #{lstm_model_forward.1} parent=0 // pred_check
    _
  $region39: #{lstm_model_forward.1} parent=0 // pred_check_branch
    %1977 = sbr.rel (0) target = $region41
  $region40: #{lstm_model_forward.1} parent=0 // pred_region
    _
  $region41: #{lstm_model_forward.1} parent=0 // pred_fallthru
    _
  // Predicated region
  $region42: #{lstm_model_forward.1} parent=0 // pred_check
    _
  $region43: #{lstm_model_forward.1} parent=0 // pred_check_branch
    %1979 = sbr.rel (0) target = $region45
  $region44: #{lstm_model_forward.1} parent=0 // pred_region
    _
  $region45: #{lstm_model_forward.1} parent=0 // pred_fallthru
    _

</llo_original>
